<compile_context>
chip_gen: v7x
topology: tpu7x:2x2x1
jax: 0.10.0
libtpu: 0.0.40
codegen_flags: <defaults>
</compile_context>

<pallas_src>
import jax
import jax.numpy as jnp
from jax import lax
from jax.experimental import pallas as pl
from jax.experimental.pallas import tpu as pltpu


def _rnn_kernel(sigma_ref, whh_ref, whsd_ref, bhe_ref, wsd_ref, bsd_ref, out_ref):
    B, L = out_ref.shape
    H = whh_ref.shape[1]

    sigma = sigma_ref[...]                                    # (B, L) read once
    col_iota = lax.broadcasted_iota(jnp.int32, (B, L), 1)
    out_acc = jnp.zeros((B, L), jnp.float32)

    h = jnp.zeros((B, H), jnp.float32)
    for i in range(L):                                        # static unroll (L small)
        if i == 0:
            # hidden state and sigma one-hot are both zero -> pre = bias only
            pre = jnp.broadcast_to(bhe_ref[0, :][None, :], (B, H))
        else:
            s = sigma[:, i - 1:i]                             # (B, 1), static slice
            pre = (jnp.dot(h, whh_ref[i],
                           preferred_element_type=jnp.float32)
                   + s * whsd_ref[i, :][None, :]              # sigma * (w1 - w0)
                   + bhe_ref[i, :][None, :])                  # bias + w0 (folded)

        # ELU (alpha = 1); clamp exp argument so the dead branch stays finite.
        h = jnp.where(pre > 0, pre, jnp.exp(jnp.minimum(pre, 0.0)) - 1.0)

        # softmax(logits)[:, 1] == sigmoid(logit_1 - logit_0)
        d = (jnp.sum(h * wsd_ref[i, :][None, :], axis=1, keepdims=True)
             + bsd_ref[i, :][None, :])                        # (B, 1)
        p1 = 1.0 / (1.0 + jnp.exp(-d))

        out_acc = jnp.where(col_iota == i, p1, out_acc)       # register-resident

    out_ref[...] = out_acc                                    # single lane-dense store


def rnn_forward(sigma_list, whh, whs, bh, ws, bs):
    B, L = sigma_list.shape
    H = whh.shape[1]

    # Host-side (trace-time) algebraic folds -- done once, not per kernel step.
    whs_diff = (whs[:, 1, :] - whs[:, 0, :]).astype(jnp.float32)       # (L, H)
    bh_eff = bh.astype(jnp.float32)
    bh_eff = bh_eff.at[1:].add(whs[1:, 0, :].astype(jnp.float32))      # (L, H)
    ws_diff = (ws[:, :, 1] - ws[:, :, 0]).astype(jnp.float32)          # (L, H)
    bs_diff = (bs[:, 1] - bs[:, 0]).astype(jnp.float32)[:, None]       # (L, 1)

    grid_spec = pltpu.PrefetchScalarGridSpec(
        num_scalar_prefetch=0,
        grid=(1,),                                     # single invocation
        in_specs=[
            pl.BlockSpec((B, L), lambda i: (0, 0)),            # sigma_list
            pl.BlockSpec((L, H, H), lambda i: (0, 0, 0)),      # whh (resident)
            pl.BlockSpec((L, H), lambda i: (0, 0)),            # whs_diff
            pl.BlockSpec((L, H), lambda i: (0, 0)),            # bh_eff
            pl.BlockSpec((L, H), lambda i: (0, 0)),            # ws_diff
            pl.BlockSpec((L, 1), lambda i: (0, 0)),            # bs_diff
        ],
        out_specs=pl.BlockSpec((B, L), lambda i: (0, 0)),
    )
    return pl.pallas_call(
        _rnn_kernel,
        out_shape=jax.ShapeDtypeStruct((B, L), jnp.float32),
        grid_spec=grid_spec,
        compiler_params=pltpu.CompilerParams(
            dimension_semantics=("arbitrary",)),
    )(sigma_list.astype(jnp.float32), whh.astype(jnp.float32),
      whs_diff, bh_eff, ws_diff, bs_diff)


def rnn_reference(sigma_list, whh, whs, bh, ws, bs):
    """Pure-JAX reference mirroring the PyTorch forward (unfolded params)."""
    B, L = sigma_list.shape
    H = whh.shape[1]
    h = jnp.zeros((B, H), jnp.float32)
    cols = []
    for i in range(L):
        if i == 0:
            sig = jnp.zeros((B, 2), jnp.float32)
        else:
            sig = jax.nn.one_hot(sigma_list[:, i - 1].astype(jnp.int32), 2,
                                 dtype=jnp.float32)
        pre = h @ whh[i] + sig @ whs[i] + bh[i]
        h = jnp.where(pre > 0, pre, jnp.exp(jnp.minimum(pre, 0.0)) - 1.0)
        logits = h @ ws[i] + bs[i]
        p = jax.nn.softmax(logits, axis=1)[:, 1]
        cols.append(p)
    return jnp.stack(cols, axis=1)


if __name__ == "__main__":
    # Small shapes consistent with the module: batch=8, hidden=32, vector_length=8
    B, H, L = 8, 32, 8
    full_dim = H + 2

    key = jax.random.PRNGKey(0)
    k_sig, k_wh, k_bh, k_ws, k_bs = jax.random.split(key, 5)

    # sigma_list: binary spins as float (as the PyTorch module expects)
    sigma_list = jax.random.bernoulli(k_sig, 0.5, (B, L)).astype(jnp.float32)

    # Deterministic parameter init mimicking nn.Linear's U(-1/sqrt(fan_in), ...)
    kh = 1.0 / jnp.sqrt(float(full_dim))
    wh_full = jax.random.uniform(k_wh, (L, full_dim, H), jnp.float32, -kh, kh)
    bh = jax.random.uniform(k_bh, (L, H), jnp.float32, -kh, kh)
    whh = wh_full[:, :H, :]      # hidden part of the concatenated input
    whs = wh_full[:, H:, :]      # one-hot(sigma) part (2 rows)

    ks = 1.0 / jnp.sqrt(float(H))
    ws = jax.random.uniform(k_ws, (L, H, 2), jnp.float32, -ks, ks)
    bs = jax.random.uniform(k_bs, (L, 2), jnp.float32, -ks, ks)

    out = rnn_forward(sigma_list, whh, whs, bh, ws, bs)
    out = jax.block_until_ready(out)

    ref = rnn_reference(sigma_list, whh, whs, bh, ws, bs)
    assert out.shape == (B, L)
    assert jnp.allclose(out, ref, rtol=1e-5, atol=1e-5), (
        f"max abs err = {jnp.max(jnp.abs(out - ref))}")

    print("KERNEL_OK")
</pallas_src>

<mosaic_0001>
module attributes {stable_mosaic.version = 11 : i64} {
  func.func @_rnn_kernel(%arg0: i32, %arg1: memref<8x8xf32, #tpu.memory_space<vmem>>, %arg2: memref<8x32x32xf32, #tpu.memory_space<vmem>>, %arg3: memref<8x32xf32, #tpu.memory_space<vmem>>, %arg4: memref<8x32xf32, #tpu.memory_space<vmem>>, %arg5: memref<8x32xf32, #tpu.memory_space<vmem>>, %arg6: memref<8x1xf32, #tpu.memory_space<vmem>>, %arg7: memref<8x8xf32, #tpu.memory_space<vmem>>) attributes {dimension_semantics = [#tpu.dimension_semantics<arbitrary>], iteration_bounds = array<i64: 1>, scalar_prefetch = 0 : i64, scratch_operands = 0 : i64, tpu.core_type = #tpu.core_type<tc>, window_params = [{pipeline_mode = #tpu.pipeline_mode<synchronous>, transform_indices = @transform_0, window_bounds = array<i64: 8, 8>}, {pipeline_mode = #tpu.pipeline_mode<synchronous>, transform_indices = @transform_1, window_bounds = array<i64: 8, 32, 32>}, {pipeline_mode = #tpu.pipeline_mode<synchronous>, transform_indices = @transform_2, window_bounds = array<i64: 8, 32>}, {pipeline_mode = #tpu.pipeline_mode<synchronous>, transform_indices = @transform_3, window_bounds = array<i64: 8, 32>}, {pipeline_mode = #tpu.pipeline_mode<synchronous>, transform_indices = @transform_4, window_bounds = array<i64: 8, 32>}, {pipeline_mode = #tpu.pipeline_mode<synchronous>, transform_indices = @transform_5, window_bounds = array<i64: 8, 1>}, {pipeline_mode = #tpu.pipeline_mode<synchronous>, transform_indices = @transform_6, window_bounds = array<i64: 8, 8>}]} {
    %c0 = arith.constant 0 : index
    %c0_0 = arith.constant 0 : index
    %0 = vector.load %arg1[%c0, %c0_0] : memref<8x8xf32, #tpu.memory_space<vmem>>, vector<8x8xf32>
    %1 = tpu.iota {dimensions = array<i32: 1>} : vector<8x8xi32>
    %cst = arith.constant 0.000000e+00 : f32
    %2 = vector.broadcast %cst : f32 to vector<8x8xf32>
    %c0_1 = arith.constant 0 : index
    %c0_2 = arith.constant 0 : index
    %3 = vector.load %arg4[%c0_1, %c0_2] : memref<8x32xf32, #tpu.memory_space<vmem>>, vector<1x32xf32>
    %4 = vector.shape_cast %3 : vector<1x32xf32> to vector<32xf32>
    %5 = vector.shape_cast %4 : vector<32xf32> to vector<1x32xf32>
    %6 = vector.shape_cast %5 : vector<1x32xf32> to vector<1x32xf32>
    %7 = vector.broadcast %6 : vector<1x32xf32> to vector<8x32xf32>
    %cst_3 = arith.constant 0.000000e+00 : f32
    %8 = vector.broadcast %cst_3 : f32 to vector<8x32xf32>
    %9 = arith.cmpf ogt, %7, %8 : vector<8x32xf32>
    %cst_4 = arith.constant 0.000000e+00 : f32
    %10 = vector.broadcast %cst_4 : f32 to vector<8x32xf32>
    %11 = arith.minimumf %7, %10 : vector<8x32xf32>
    %12 = math.exp %11 : vector<8x32xf32>
    %cst_5 = arith.constant 1.000000e+00 : f32
    %13 = vector.broadcast %cst_5 : f32 to vector<8x32xf32>
    %14 = arith.subf %12, %13 : vector<8x32xf32>
    %15 = arith.select %9, %7, %14 : vector<8x32xi1>, vector<8x32xf32>
    %c0_6 = arith.constant 0 : index
    %c0_7 = arith.constant 0 : index
    %16 = vector.load %arg5[%c0_6, %c0_7] : memref<8x32xf32, #tpu.memory_space<vmem>>, vector<1x32xf32>
    %17 = vector.shape_cast %16 : vector<1x32xf32> to vector<32xf32>
    %18 = vector.shape_cast %17 : vector<32xf32> to vector<1x32xf32>
    %19 = vector.broadcast %18 : vector<1x32xf32> to vector<8x32xf32>
    %20 = arith.mulf %15, %19 : vector<8x32xf32>
    %cst_8 = arith.constant dense<0.000000e+00> : vector<8xf32>
    %21 = vector.multi_reduction <add>, %20, %cst_8 [1] : vector<8x32xf32> to vector<8xf32>
    %22 = vector.shape_cast %21 : vector<8xf32> to vector<8x1xf32>
    %c0_9 = arith.constant 0 : index
    %c0_10 = arith.constant 0 : index
    %23 = vector.load %arg6[%c0_9, %c0_10] : memref<8x1xf32, #tpu.memory_space<vmem>>, vector<1x1xf32>
    %24 = vector.shape_cast %23 : vector<1x1xf32> to vector<1xf32>
    %25 = vector.shape_cast %24 : vector<1xf32> to vector<1x1xf32>
    %26 = vector.broadcast %25 : vector<1x1xf32> to vector<8x1xf32>
    %27 = arith.addf %22, %26 : vector<8x1xf32>
    %cst_11 = arith.constant 0.000000e+00 : f32
    %28 = vector.broadcast %cst_11 : f32 to vector<8x1xf32>
    %29 = arith.subf %28, %27 : vector<8x1xf32>
    %30 = math.exp %29 : vector<8x1xf32>
    %cst_12 = arith.constant 1.000000e+00 : f32
    %31 = vector.broadcast %cst_12 : f32 to vector<8x1xf32>
    %32 = arith.addf %31, %30 : vector<8x1xf32>
    %cst_13 = arith.constant 1.000000e+00 : f32
    %33 = vector.broadcast %cst_13 : f32 to vector<8x1xf32>
    %34 = arith.divf %33, %32 : vector<8x1xf32>
    %c0_i32 = arith.constant 0 : i32
    %35 = vector.broadcast %c0_i32 : i32 to vector<8x8xi32>
    %36 = arith.cmpi eq, %1, %35 : vector<8x8xi32>
    %37 = vector.shape_cast %34 : vector<8x1xf32> to vector<8x1xf32>
    %38 = vector.broadcast %37 : vector<8x1xf32> to vector<8x8xf32>
    %39 = arith.select %36, %38, %2 : vector<8x8xi1>, vector<8x8xf32>
    %40 = vector.extract_strided_slice %0 {offsets = [0, 0], sizes = [8, 1], strides = [1, 1]} : vector<8x8xf32> to vector<8x1xf32>
    %c1 = arith.constant 1 : index
    %c0_14 = arith.constant 0 : index
    %c0_15 = arith.constant 0 : index
    %41 = vector.load %arg2[%c1, %c0_14, %c0_15] : memref<8x32x32xf32, #tpu.memory_space<vmem>>, vector<1x32x32xf32>
    %42 = vector.shape_cast %41 : vector<1x32x32xf32> to vector<32x32xf32>
    %cst_16 = arith.constant dense<0.000000e+00> : vector<8x32xf32>
    %43 = tpu.matmul %15, %42, %cst_16 {dimension_numbers = #tpu.dot_dimension_numbers<[1], [0], [0], [1], [0, 0, 1, 1], [], []>} : vector<8x32xf32>, vector<32x32xf32>, vector<8x32xf32> -> vector<8x32xf32>
    %c1_17 = arith.constant 1 : index
    %c0_18 = arith.constant 0 : index
    %44 = vector.load %arg3[%c1_17, %c0_18] : memref<8x32xf32, #tpu.memory_space<vmem>>, vector<1x32xf32>
    %45 = vector.shape_cast %44 : vector<1x32xf32> to vector<32xf32>
    %46 = vector.shape_cast %45 : vector<32xf32> to vector<1x32xf32>
    %47 = vector.broadcast %40 : vector<8x1xf32> to vector<8x32xf32>
    %48 = vector.broadcast %46 : vector<1x32xf32> to vector<8x32xf32>
    %49 = arith.mulf %47, %48 : vector<8x32xf32>
    %50 = arith.addf %43, %49 : vector<8x32xf32>
    %c1_19 = arith.constant 1 : index
    %c0_20 = arith.constant 0 : index
    %51 = vector.load %arg4[%c1_19, %c0_20] : memref<8x32xf32, #tpu.memory_space<vmem>>, vector<1x32xf32>
    %52 = vector.shape_cast %51 : vector<1x32xf32> to vector<32xf32>
    %53 = vector.shape_cast %52 : vector<32xf32> to vector<1x32xf32>
    %54 = vector.broadcast %53 : vector<1x32xf32> to vector<8x32xf32>
    %55 = arith.addf %50, %54 : vector<8x32xf32>
    %cst_21 = arith.constant 0.000000e+00 : f32
    %56 = vector.broadcast %cst_21 : f32 to vector<8x32xf32>
    %57 = arith.cmpf ogt, %55, %56 : vector<8x32xf32>
    %cst_22 = arith.constant 0.000000e+00 : f32
    %58 = vector.broadcast %cst_22 : f32 to vector<8x32xf32>
    %59 = arith.minimumf %55, %58 : vector<8x32xf32>
    %60 = math.exp %59 : vector<8x32xf32>
    %cst_23 = arith.constant 1.000000e+00 : f32
    %61 = vector.broadcast %cst_23 : f32 to vector<8x32xf32>
    %62 = arith.subf %60, %61 : vector<8x32xf32>
    %63 = arith.select %57, %55, %62 : vector<8x32xi1>, vector<8x32xf32>
    %c1_24 = arith.constant 1 : index
    %c0_25 = arith.constant 0 : index
    %64 = vector.load %arg5[%c1_24, %c0_25] : memref<8x32xf32, #tpu.memory_space<vmem>>, vector<1x32xf32>
    %65 = vector.shape_cast %64 : vector<1x32xf32> to vector<32xf32>
    %66 = vector.shape_cast %65 : vector<32xf32> to vector<1x32xf32>
    %67 = vector.broadcast %66 : vector<1x32xf32> to vector<8x32xf32>
    %68 = arith.mulf %63, %67 : vector<8x32xf32>
    %cst_26 = arith.constant dense<0.000000e+00> : vector<8xf32>
    %69 = vector.multi_reduction <add>, %68, %cst_26 [1] : vector<8x32xf32> to vector<8xf32>
    %70 = vector.shape_cast %69 : vector<8xf32> to vector<8x1xf32>
    %c1_27 = arith.constant 1 : index
    %c0_28 = arith.constant 0 : index
    %71 = vector.load %arg6[%c1_27, %c0_28] : memref<8x1xf32, #tpu.memory_space<vmem>>, vector<1x1xf32>
    %72 = vector.shape_cast %71 : vector<1x1xf32> to vector<1xf32>
    %73 = vector.shape_cast %72 : vector<1xf32> to vector<1x1xf32>
    %74 = vector.broadcast %73 : vector<1x1xf32> to vector<8x1xf32>
    %75 = arith.addf %70, %74 : vector<8x1xf32>
    %cst_29 = arith.constant 0.000000e+00 : f32
    %76 = vector.broadcast %cst_29 : f32 to vector<8x1xf32>
    %77 = arith.subf %76, %75 : vector<8x1xf32>
    %78 = math.exp %77 : vector<8x1xf32>
    %cst_30 = arith.constant 1.000000e+00 : f32
    %79 = vector.broadcast %cst_30 : f32 to vector<8x1xf32>
    %80 = arith.addf %79, %78 : vector<8x1xf32>
    %cst_31 = arith.constant 1.000000e+00 : f32
    %81 = vector.broadcast %cst_31 : f32 to vector<8x1xf32>
    %82 = arith.divf %81, %80 : vector<8x1xf32>
    %c1_i32 = arith.constant 1 : i32
    %83 = vector.broadcast %c1_i32 : i32 to vector<8x8xi32>
    %84 = arith.cmpi eq, %1, %83 : vector<8x8xi32>
    %85 = vector.shape_cast %82 : vector<8x1xf32> to vector<8x1xf32>
    %86 = vector.broadcast %85 : vector<8x1xf32> to vector<8x8xf32>
    %87 = arith.select %84, %86, %39 : vector<8x8xi1>, vector<8x8xf32>
    %88 = vector.extract_strided_slice %0 {offsets = [0, 1], sizes = [8, 1], strides = [1, 1]} : vector<8x8xf32> to vector<8x1xf32>
    %c2 = arith.constant 2 : index
    %c0_32 = arith.constant 0 : index
    %c0_33 = arith.constant 0 : index
    %89 = vector.load %arg2[%c2, %c0_32, %c0_33] : memref<8x32x32xf32, #tpu.memory_space<vmem>>, vector<1x32x32xf32>
    %90 = vector.shape_cast %89 : vector<1x32x32xf32> to vector<32x32xf32>
    %cst_34 = arith.constant dense<0.000000e+00> : vector<8x32xf32>
    %91 = tpu.matmul %63, %90, %cst_34 {dimension_numbers = #tpu.dot_dimension_numbers<[1], [0], [0], [1], [0, 0, 1, 1], [], []>} : vector<8x32xf32>, vector<32x32xf32>, vector<8x32xf32> -> vector<8x32xf32>
    %c2_35 = arith.constant 2 : index
    %c0_36 = arith.constant 0 : index
    %92 = vector.load %arg3[%c2_35, %c0_36] : memref<8x32xf32, #tpu.memory_space<vmem>>, vector<1x32xf32>
    %93 = vector.shape_cast %92 : vector<1x32xf32> to vector<32xf32>
    %94 = vector.shape_cast %93 : vector<32xf32> to vector<1x32xf32>
    %95 = vector.broadcast %88 : vector<8x1xf32> to vector<8x32xf32>
    %96 = vector.broadcast %94 : vector<1x32xf32> to vector<8x32xf32>
    %97 = arith.mulf %95, %96 : vector<8x32xf32>
    %98 = arith.addf %91, %97 : vector<8x32xf32>
    %c2_37 = arith.constant 2 : index
    %c0_38 = arith.constant 0 : index
    %99 = vector.load %arg4[%c2_37, %c0_38] : memref<8x32xf32, #tpu.memory_space<vmem>>, vector<1x32xf32>
    %100 = vector.shape_cast %99 : vector<1x32xf32> to vector<32xf32>
    %101 = vector.shape_cast %100 : vector<32xf32> to vector<1x32xf32>
    %102 = vector.broadcast %101 : vector<1x32xf32> to vector<8x32xf32>
    %103 = arith.addf %98, %102 : vector<8x32xf32>
    %cst_39 = arith.constant 0.000000e+00 : f32
    %104 = vector.broadcast %cst_39 : f32 to vector<8x32xf32>
    %105 = arith.cmpf ogt, %103, %104 : vector<8x32xf32>
    %cst_40 = arith.constant 0.000000e+00 : f32
    %106 = vector.broadcast %cst_40 : f32 to vector<8x32xf32>
    %107 = arith.minimumf %103, %106 : vector<8x32xf32>
    %108 = math.exp %107 : vector<8x32xf32>
    %cst_41 = arith.constant 1.000000e+00 : f32
    %109 = vector.broadcast %cst_41 : f32 to vector<8x32xf32>
    %110 = arith.subf %108, %109 : vector<8x32xf32>
    %111 = arith.select %105, %103, %110 : vector<8x32xi1>, vector<8x32xf32>
    %c2_42 = arith.constant 2 : index
    %c0_43 = arith.constant 0 : index
    %112 = vector.load %arg5[%c2_42, %c0_43] : memref<8x32xf32, #tpu.memory_space<vmem>>, vector<1x32xf32>
    %113 = vector.shape_cast %112 : vector<1x32xf32> to vector<32xf32>
    %114 = vector.shape_cast %113 : vector<32xf32> to vector<1x32xf32>
    %115 = vector.broadcast %114 : vector<1x32xf32> to vector<8x32xf32>
    %116 = arith.mulf %111, %115 : vector<8x32xf32>
    %cst_44 = arith.constant dense<0.000000e+00> : vector<8xf32>
    %117 = vector.multi_reduction <add>, %116, %cst_44 [1] : vector<8x32xf32> to vector<8xf32>
    %118 = vector.shape_cast %117 : vector<8xf32> to vector<8x1xf32>
    %c2_45 = arith.constant 2 : index
    %c0_46 = arith.constant 0 : index
    %119 = vector.load %arg6[%c2_45, %c0_46] : memref<8x1xf32, #tpu.memory_space<vmem>>, vector<1x1xf32>
    %120 = vector.shape_cast %119 : vector<1x1xf32> to vector<1xf32>
    %121 = vector.shape_cast %120 : vector<1xf32> to vector<1x1xf32>
    %122 = vector.broadcast %121 : vector<1x1xf32> to vector<8x1xf32>
    %123 = arith.addf %118, %122 : vector<8x1xf32>
    %cst_47 = arith.constant 0.000000e+00 : f32
    %124 = vector.broadcast %cst_47 : f32 to vector<8x1xf32>
    %125 = arith.subf %124, %123 : vector<8x1xf32>
    %126 = math.exp %125 : vector<8x1xf32>
    %cst_48 = arith.constant 1.000000e+00 : f32
    %127 = vector.broadcast %cst_48 : f32 to vector<8x1xf32>
    %128 = arith.addf %127, %126 : vector<8x1xf32>
    %cst_49 = arith.constant 1.000000e+00 : f32
    %129 = vector.broadcast %cst_49 : f32 to vector<8x1xf32>
    %130 = arith.divf %129, %128 : vector<8x1xf32>
    %c2_i32 = arith.constant 2 : i32
    %131 = vector.broadcast %c2_i32 : i32 to vector<8x8xi32>
    %132 = arith.cmpi eq, %1, %131 : vector<8x8xi32>
    %133 = vector.shape_cast %130 : vector<8x1xf32> to vector<8x1xf32>
    %134 = vector.broadcast %133 : vector<8x1xf32> to vector<8x8xf32>
    %135 = arith.select %132, %134, %87 : vector<8x8xi1>, vector<8x8xf32>
    %136 = vector.extract_strided_slice %0 {offsets = [0, 2], sizes = [8, 1], strides = [1, 1]} : vector<8x8xf32> to vector<8x1xf32>
    %c3 = arith.constant 3 : index
    %c0_50 = arith.constant 0 : index
    %c0_51 = arith.constant 0 : index
    %137 = vector.load %arg2[%c3, %c0_50, %c0_51] : memref<8x32x32xf32, #tpu.memory_space<vmem>>, vector<1x32x32xf32>
    %138 = vector.shape_cast %137 : vector<1x32x32xf32> to vector<32x32xf32>
    %cst_52 = arith.constant dense<0.000000e+00> : vector<8x32xf32>
    %139 = tpu.matmul %111, %138, %cst_52 {dimension_numbers = #tpu.dot_dimension_numbers<[1], [0], [0], [1], [0, 0, 1, 1], [], []>} : vector<8x32xf32>, vector<32x32xf32>, vector<8x32xf32> -> vector<8x32xf32>
    %c3_53 = arith.constant 3 : index
    %c0_54 = arith.constant 0 : index
    %140 = vector.load %arg3[%c3_53, %c0_54] : memref<8x32xf32, #tpu.memory_space<vmem>>, vector<1x32xf32>
    %141 = vector.shape_cast %140 : vector<1x32xf32> to vector<32xf32>
    %142 = vector.shape_cast %141 : vector<32xf32> to vector<1x32xf32>
    %143 = vector.broadcast %136 : vector<8x1xf32> to vector<8x32xf32>
    %144 = vector.broadcast %142 : vector<1x32xf32> to vector<8x32xf32>
    %145 = arith.mulf %143, %144 : vector<8x32xf32>
    %146 = arith.addf %139, %145 : vector<8x32xf32>
    %c3_55 = arith.constant 3 : index
    %c0_56 = arith.constant 0 : index
    %147 = vector.load %arg4[%c3_55, %c0_56] : memref<8x32xf32, #tpu.memory_space<vmem>>, vector<1x32xf32>
    %148 = vector.shape_cast %147 : vector<1x32xf32> to vector<32xf32>
    %149 = vector.shape_cast %148 : vector<32xf32> to vector<1x32xf32>
    %150 = vector.broadcast %149 : vector<1x32xf32> to vector<8x32xf32>
    %151 = arith.addf %146, %150 : vector<8x32xf32>
    %cst_57 = arith.constant 0.000000e+00 : f32
    %152 = vector.broadcast %cst_57 : f32 to vector<8x32xf32>
    %153 = arith.cmpf ogt, %151, %152 : vector<8x32xf32>
    %cst_58 = arith.constant 0.000000e+00 : f32
    %154 = vector.broadcast %cst_58 : f32 to vector<8x32xf32>
    %155 = arith.minimumf %151, %154 : vector<8x32xf32>
    %156 = math.exp %155 : vector<8x32xf32>
    %cst_59 = arith.constant 1.000000e+00 : f32
    %157 = vector.broadcast %cst_59 : f32 to vector<8x32xf32>
    %158 = arith.subf %156, %157 : vector<8x32xf32>
    %159 = arith.select %153, %151, %158 : vector<8x32xi1>, vector<8x32xf32>
    %c3_60 = arith.constant 3 : index
    %c0_61 = arith.constant 0 : index
    %160 = vector.load %arg5[%c3_60, %c0_61] : memref<8x32xf32, #tpu.memory_space<vmem>>, vector<1x32xf32>
    %161 = vector.shape_cast %160 : vector<1x32xf32> to vector<32xf32>
    %162 = vector.shape_cast %161 : vector<32xf32> to vector<1x32xf32>
    %163 = vector.broadcast %162 : vector<1x32xf32> to vector<8x32xf32>
    %164 = arith.mulf %159, %163 : vector<8x32xf32>
    %cst_62 = arith.constant dense<0.000000e+00> : vector<8xf32>
    %165 = vector.multi_reduction <add>, %164, %cst_62 [1] : vector<8x32xf32> to vector<8xf32>
    %166 = vector.shape_cast %165 : vector<8xf32> to vector<8x1xf32>
    %c3_63 = arith.constant 3 : index
    %c0_64 = arith.constant 0 : index
    %167 = vector.load %arg6[%c3_63, %c0_64] : memref<8x1xf32, #tpu.memory_space<vmem>>, vector<1x1xf32>
    %168 = vector.shape_cast %167 : vector<1x1xf32> to vector<1xf32>
    %169 = vector.shape_cast %168 : vector<1xf32> to vector<1x1xf32>
    %170 = vector.broadcast %169 : vector<1x1xf32> to vector<8x1xf32>
    %171 = arith.addf %166, %170 : vector<8x1xf32>
    %cst_65 = arith.constant 0.000000e+00 : f32
    %172 = vector.broadcast %cst_65 : f32 to vector<8x1xf32>
    %173 = arith.subf %172, %171 : vector<8x1xf32>
    %174 = math.exp %173 : vector<8x1xf32>
    %cst_66 = arith.constant 1.000000e+00 : f32
    %175 = vector.broadcast %cst_66 : f32 to vector<8x1xf32>
    %176 = arith.addf %175, %174 : vector<8x1xf32>
    %cst_67 = arith.constant 1.000000e+00 : f32
    %177 = vector.broadcast %cst_67 : f32 to vector<8x1xf32>
    %178 = arith.divf %177, %176 : vector<8x1xf32>
    %c3_i32 = arith.constant 3 : i32
    %179 = vector.broadcast %c3_i32 : i32 to vector<8x8xi32>
    %180 = arith.cmpi eq, %1, %179 : vector<8x8xi32>
    %181 = vector.shape_cast %178 : vector<8x1xf32> to vector<8x1xf32>
    %182 = vector.broadcast %181 : vector<8x1xf32> to vector<8x8xf32>
    %183 = arith.select %180, %182, %135 : vector<8x8xi1>, vector<8x8xf32>
    %184 = vector.extract_strided_slice %0 {offsets = [0, 3], sizes = [8, 1], strides = [1, 1]} : vector<8x8xf32> to vector<8x1xf32>
    %c4 = arith.constant 4 : index
    %c0_68 = arith.constant 0 : index
    %c0_69 = arith.constant 0 : index
    %185 = vector.load %arg2[%c4, %c0_68, %c0_69] : memref<8x32x32xf32, #tpu.memory_space<vmem>>, vector<1x32x32xf32>
    %186 = vector.shape_cast %185 : vector<1x32x32xf32> to vector<32x32xf32>
    %cst_70 = arith.constant dense<0.000000e+00> : vector<8x32xf32>
    %187 = tpu.matmul %159, %186, %cst_70 {dimension_numbers = #tpu.dot_dimension_numbers<[1], [0], [0], [1], [0, 0, 1, 1], [], []>} : vector<8x32xf32>, vector<32x32xf32>, vector<8x32xf32> -> vector<8x32xf32>
    %c4_71 = arith.constant 4 : index
    %c0_72 = arith.constant 0 : index
    %188 = vector.load %arg3[%c4_71, %c0_72] : memref<8x32xf32, #tpu.memory_space<vmem>>, vector<1x32xf32>
    %189 = vector.shape_cast %188 : vector<1x32xf32> to vector<32xf32>
    %190 = vector.shape_cast %189 : vector<32xf32> to vector<1x32xf32>
    %191 = vector.broadcast %184 : vector<8x1xf32> to vector<8x32xf32>
    %192 = vector.broadcast %190 : vector<1x32xf32> to vector<8x32xf32>
    %193 = arith.mulf %191, %192 : vector<8x32xf32>
    %194 = arith.addf %187, %193 : vector<8x32xf32>
    %c4_73 = arith.constant 4 : index
    %c0_74 = arith.constant 0 : index
    %195 = vector.load %arg4[%c4_73, %c0_74] : memref<8x32xf32, #tpu.memory_space<vmem>>, vector<1x32xf32>
    %196 = vector.shape_cast %195 : vector<1x32xf32> to vector<32xf32>
    %197 = vector.shape_cast %196 : vector<32xf32> to vector<1x32xf32>
    %198 = vector.broadcast %197 : vector<1x32xf32> to vector<8x32xf32>
    %199 = arith.addf %194, %198 : vector<8x32xf32>
    %cst_75 = arith.constant 0.000000e+00 : f32
    %200 = vector.broadcast %cst_75 : f32 to vector<8x32xf32>
    %201 = arith.cmpf ogt, %199, %200 : vector<8x32xf32>
    %cst_76 = arith.constant 0.000000e+00 : f32
    %202 = vector.broadcast %cst_76 : f32 to vector<8x32xf32>
    %203 = arith.minimumf %199, %202 : vector<8x32xf32>
    %204 = math.exp %203 : vector<8x32xf32>
    %cst_77 = arith.constant 1.000000e+00 : f32
    %205 = vector.broadcast %cst_77 : f32 to vector<8x32xf32>
    %206 = arith.subf %204, %205 : vector<8x32xf32>
    %207 = arith.select %201, %199, %206 : vector<8x32xi1>, vector<8x32xf32>
    %c4_78 = arith.constant 4 : index
    %c0_79 = arith.constant 0 : index
    %208 = vector.load %arg5[%c4_78, %c0_79] : memref<8x32xf32, #tpu.memory_space<vmem>>, vector<1x32xf32>
    %209 = vector.shape_cast %208 : vector<1x32xf32> to vector<32xf32>
    %210 = vector.shape_cast %209 : vector<32xf32> to vector<1x32xf32>
    %211 = vector.broadcast %210 : vector<1x32xf32> to vector<8x32xf32>
    %212 = arith.mulf %207, %211 : vector<8x32xf32>
    %cst_80 = arith.constant dense<0.000000e+00> : vector<8xf32>
    %213 = vector.multi_reduction <add>, %212, %cst_80 [1] : vector<8x32xf32> to vector<8xf32>
    %214 = vector.shape_cast %213 : vector<8xf32> to vector<8x1xf32>
    %c4_81 = arith.constant 4 : index
    %c0_82 = arith.constant 0 : index
    %215 = vector.load %arg6[%c4_81, %c0_82] : memref<8x1xf32, #tpu.memory_space<vmem>>, vector<1x1xf32>
    %216 = vector.shape_cast %215 : vector<1x1xf32> to vector<1xf32>
    %217 = vector.shape_cast %216 : vector<1xf32> to vector<1x1xf32>
    %218 = vector.broadcast %217 : vector<1x1xf32> to vector<8x1xf32>
    %219 = arith.addf %214, %218 : vector<8x1xf32>
    %cst_83 = arith.constant 0.000000e+00 : f32
    %220 = vector.broadcast %cst_83 : f32 to vector<8x1xf32>
    %221 = arith.subf %220, %219 : vector<8x1xf32>
    %222 = math.exp %221 : vector<8x1xf32>
    %cst_84 = arith.constant 1.000000e+00 : f32
    %223 = vector.broadcast %cst_84 : f32 to vector<8x1xf32>
    %224 = arith.addf %223, %222 : vector<8x1xf32>
    %cst_85 = arith.constant 1.000000e+00 : f32
    %225 = vector.broadcast %cst_85 : f32 to vector<8x1xf32>
    %226 = arith.divf %225, %224 : vector<8x1xf32>
    %c4_i32 = arith.constant 4 : i32
    %227 = vector.broadcast %c4_i32 : i32 to vector<8x8xi32>
    %228 = arith.cmpi eq, %1, %227 : vector<8x8xi32>
    %229 = vector.shape_cast %226 : vector<8x1xf32> to vector<8x1xf32>
    %230 = vector.broadcast %229 : vector<8x1xf32> to vector<8x8xf32>
    %231 = arith.select %228, %230, %183 : vector<8x8xi1>, vector<8x8xf32>
    %232 = vector.extract_strided_slice %0 {offsets = [0, 4], sizes = [8, 1], strides = [1, 1]} : vector<8x8xf32> to vector<8x1xf32>
    %c5 = arith.constant 5 : index
    %c0_86 = arith.constant 0 : index
    %c0_87 = arith.constant 0 : index
    %233 = vector.load %arg2[%c5, %c0_86, %c0_87] : memref<8x32x32xf32, #tpu.memory_space<vmem>>, vector<1x32x32xf32>
    %234 = vector.shape_cast %233 : vector<1x32x32xf32> to vector<32x32xf32>
    %cst_88 = arith.constant dense<0.000000e+00> : vector<8x32xf32>
    %235 = tpu.matmul %207, %234, %cst_88 {dimension_numbers = #tpu.dot_dimension_numbers<[1], [0], [0], [1], [0, 0, 1, 1], [], []>} : vector<8x32xf32>, vector<32x32xf32>, vector<8x32xf32> -> vector<8x32xf32>
    %c5_89 = arith.constant 5 : index
    %c0_90 = arith.constant 0 : index
    %236 = vector.load %arg3[%c5_89, %c0_90] : memref<8x32xf32, #tpu.memory_space<vmem>>, vector<1x32xf32>
    %237 = vector.shape_cast %236 : vector<1x32xf32> to vector<32xf32>
    %238 = vector.shape_cast %237 : vector<32xf32> to vector<1x32xf32>
    %239 = vector.broadcast %232 : vector<8x1xf32> to vector<8x32xf32>
    %240 = vector.broadcast %238 : vector<1x32xf32> to vector<8x32xf32>
    %241 = arith.mulf %239, %240 : vector<8x32xf32>
    %242 = arith.addf %235, %241 : vector<8x32xf32>
    %c5_91 = arith.constant 5 : index
    %c0_92 = arith.constant 0 : index
    %243 = vector.load %arg4[%c5_91, %c0_92] : memref<8x32xf32, #tpu.memory_space<vmem>>, vector<1x32xf32>
    %244 = vector.shape_cast %243 : vector<1x32xf32> to vector<32xf32>
    %245 = vector.shape_cast %244 : vector<32xf32> to vector<1x32xf32>
    %246 = vector.broadcast %245 : vector<1x32xf32> to vector<8x32xf32>
    %247 = arith.addf %242, %246 : vector<8x32xf32>
    %cst_93 = arith.constant 0.000000e+00 : f32
    %248 = vector.broadcast %cst_93 : f32 to vector<8x32xf32>
    %249 = arith.cmpf ogt, %247, %248 : vector<8x32xf32>
    %cst_94 = arith.constant 0.000000e+00 : f32
    %250 = vector.broadcast %cst_94 : f32 to vector<8x32xf32>
    %251 = arith.minimumf %247, %250 : vector<8x32xf32>
    %252 = math.exp %251 : vector<8x32xf32>
    %cst_95 = arith.constant 1.000000e+00 : f32
    %253 = vector.broadcast %cst_95 : f32 to vector<8x32xf32>
    %254 = arith.subf %252, %253 : vector<8x32xf32>
    %255 = arith.select %249, %247, %254 : vector<8x32xi1>, vector<8x32xf32>
    %c5_96 = arith.constant 5 : index
    %c0_97 = arith.constant 0 : index
    %256 = vector.load %arg5[%c5_96, %c0_97] : memref<8x32xf32, #tpu.memory_space<vmem>>, vector<1x32xf32>
    %257 = vector.shape_cast %256 : vector<1x32xf32> to vector<32xf32>
    %258 = vector.shape_cast %257 : vector<32xf32> to vector<1x32xf32>
    %259 = vector.broadcast %258 : vector<1x32xf32> to vector<8x32xf32>
    %260 = arith.mulf %255, %259 : vector<8x32xf32>
    %cst_98 = arith.constant dense<0.000000e+00> : vector<8xf32>
    %261 = vector.multi_reduction <add>, %260, %cst_98 [1] : vector<8x32xf32> to vector<8xf32>
    %262 = vector.shape_cast %261 : vector<8xf32> to vector<8x1xf32>
    %c5_99 = arith.constant 5 : index
    %c0_100 = arith.constant 0 : index
    %263 = vector.load %arg6[%c5_99, %c0_100] : memref<8x1xf32, #tpu.memory_space<vmem>>, vector<1x1xf32>
    %264 = vector.shape_cast %263 : vector<1x1xf32> to vector<1xf32>
    %265 = vector.shape_cast %264 : vector<1xf32> to vector<1x1xf32>
    %266 = vector.broadcast %265 : vector<1x1xf32> to vector<8x1xf32>
    %267 = arith.addf %262, %266 : vector<8x1xf32>
    %cst_101 = arith.constant 0.000000e+00 : f32
    %268 = vector.broadcast %cst_101 : f32 to vector<8x1xf32>
    %269 = arith.subf %268, %267 : vector<8x1xf32>
    %270 = math.exp %269 : vector<8x1xf32>
    %cst_102 = arith.constant 1.000000e+00 : f32
    %271 = vector.broadcast %cst_102 : f32 to vector<8x1xf32>
    %272 = arith.addf %271, %270 : vector<8x1xf32>
    %cst_103 = arith.constant 1.000000e+00 : f32
    %273 = vector.broadcast %cst_103 : f32 to vector<8x1xf32>
    %274 = arith.divf %273, %272 : vector<8x1xf32>
    %c5_i32 = arith.constant 5 : i32
    %275 = vector.broadcast %c5_i32 : i32 to vector<8x8xi32>
    %276 = arith.cmpi eq, %1, %275 : vector<8x8xi32>
    %277 = vector.shape_cast %274 : vector<8x1xf32> to vector<8x1xf32>
    %278 = vector.broadcast %277 : vector<8x1xf32> to vector<8x8xf32>
    %279 = arith.select %276, %278, %231 : vector<8x8xi1>, vector<8x8xf32>
    %280 = vector.extract_strided_slice %0 {offsets = [0, 5], sizes = [8, 1], strides = [1, 1]} : vector<8x8xf32> to vector<8x1xf32>
    %c6 = arith.constant 6 : index
    %c0_104 = arith.constant 0 : index
    %c0_105 = arith.constant 0 : index
    %281 = vector.load %arg2[%c6, %c0_104, %c0_105] : memref<8x32x32xf32, #tpu.memory_space<vmem>>, vector<1x32x32xf32>
    %282 = vector.shape_cast %281 : vector<1x32x32xf32> to vector<32x32xf32>
    %cst_106 = arith.constant dense<0.000000e+00> : vector<8x32xf32>
    %283 = tpu.matmul %255, %282, %cst_106 {dimension_numbers = #tpu.dot_dimension_numbers<[1], [0], [0], [1], [0, 0, 1, 1], [], []>} : vector<8x32xf32>, vector<32x32xf32>, vector<8x32xf32> -> vector<8x32xf32>
    %c6_107 = arith.constant 6 : index
    %c0_108 = arith.constant 0 : index
    %284 = vector.load %arg3[%c6_107, %c0_108] : memref<8x32xf32, #tpu.memory_space<vmem>>, vector<1x32xf32>
    %285 = vector.shape_cast %284 : vector<1x32xf32> to vector<32xf32>
    %286 = vector.shape_cast %285 : vector<32xf32> to vector<1x32xf32>
    %287 = vector.broadcast %280 : vector<8x1xf32> to vector<8x32xf32>
    %288 = vector.broadcast %286 : vector<1x32xf32> to vector<8x32xf32>
    %289 = arith.mulf %287, %288 : vector<8x32xf32>
    %290 = arith.addf %283, %289 : vector<8x32xf32>
    %c6_109 = arith.constant 6 : index
    %c0_110 = arith.constant 0 : index
    %291 = vector.load %arg4[%c6_109, %c0_110] : memref<8x32xf32, #tpu.memory_space<vmem>>, vector<1x32xf32>
    %292 = vector.shape_cast %291 : vector<1x32xf32> to vector<32xf32>
    %293 = vector.shape_cast %292 : vector<32xf32> to vector<1x32xf32>
    %294 = vector.broadcast %293 : vector<1x32xf32> to vector<8x32xf32>
    %295 = arith.addf %290, %294 : vector<8x32xf32>
    %cst_111 = arith.constant 0.000000e+00 : f32
    %296 = vector.broadcast %cst_111 : f32 to vector<8x32xf32>
    %297 = arith.cmpf ogt, %295, %296 : vector<8x32xf32>
    %cst_112 = arith.constant 0.000000e+00 : f32
    %298 = vector.broadcast %cst_112 : f32 to vector<8x32xf32>
    %299 = arith.minimumf %295, %298 : vector<8x32xf32>
    %300 = math.exp %299 : vector<8x32xf32>
    %cst_113 = arith.constant 1.000000e+00 : f32
    %301 = vector.broadcast %cst_113 : f32 to vector<8x32xf32>
    %302 = arith.subf %300, %301 : vector<8x32xf32>
    %303 = arith.select %297, %295, %302 : vector<8x32xi1>, vector<8x32xf32>
    %c6_114 = arith.constant 6 : index
    %c0_115 = arith.constant 0 : index
    %304 = vector.load %arg5[%c6_114, %c0_115] : memref<8x32xf32, #tpu.memory_space<vmem>>, vector<1x32xf32>
    %305 = vector.shape_cast %304 : vector<1x32xf32> to vector<32xf32>
    %306 = vector.shape_cast %305 : vector<32xf32> to vector<1x32xf32>
    %307 = vector.broadcast %306 : vector<1x32xf32> to vector<8x32xf32>
    %308 = arith.mulf %303, %307 : vector<8x32xf32>
    %cst_116 = arith.constant dense<0.000000e+00> : vector<8xf32>
    %309 = vector.multi_reduction <add>, %308, %cst_116 [1] : vector<8x32xf32> to vector<8xf32>
    %310 = vector.shape_cast %309 : vector<8xf32> to vector<8x1xf32>
    %c6_117 = arith.constant 6 : index
    %c0_118 = arith.constant 0 : index
    %311 = vector.load %arg6[%c6_117, %c0_118] : memref<8x1xf32, #tpu.memory_space<vmem>>, vector<1x1xf32>
    %312 = vector.shape_cast %311 : vector<1x1xf32> to vector<1xf32>
    %313 = vector.shape_cast %312 : vector<1xf32> to vector<1x1xf32>
    %314 = vector.broadcast %313 : vector<1x1xf32> to vector<8x1xf32>
    %315 = arith.addf %310, %314 : vector<8x1xf32>
    %cst_119 = arith.constant 0.000000e+00 : f32
    %316 = vector.broadcast %cst_119 : f32 to vector<8x1xf32>
    %317 = arith.subf %316, %315 : vector<8x1xf32>
    %318 = math.exp %317 : vector<8x1xf32>
    %cst_120 = arith.constant 1.000000e+00 : f32
    %319 = vector.broadcast %cst_120 : f32 to vector<8x1xf32>
    %320 = arith.addf %319, %318 : vector<8x1xf32>
    %cst_121 = arith.constant 1.000000e+00 : f32
    %321 = vector.broadcast %cst_121 : f32 to vector<8x1xf32>
    %322 = arith.divf %321, %320 : vector<8x1xf32>
    %c6_i32 = arith.constant 6 : i32
    %323 = vector.broadcast %c6_i32 : i32 to vector<8x8xi32>
    %324 = arith.cmpi eq, %1, %323 : vector<8x8xi32>
    %325 = vector.shape_cast %322 : vector<8x1xf32> to vector<8x1xf32>
    %326 = vector.broadcast %325 : vector<8x1xf32> to vector<8x8xf32>
    %327 = arith.select %324, %326, %279 : vector<8x8xi1>, vector<8x8xf32>
    %328 = vector.extract_strided_slice %0 {offsets = [0, 6], sizes = [8, 1], strides = [1, 1]} : vector<8x8xf32> to vector<8x1xf32>
    %c7 = arith.constant 7 : index
    %c0_122 = arith.constant 0 : index
    %c0_123 = arith.constant 0 : index
    %329 = vector.load %arg2[%c7, %c0_122, %c0_123] : memref<8x32x32xf32, #tpu.memory_space<vmem>>, vector<1x32x32xf32>
    %330 = vector.shape_cast %329 : vector<1x32x32xf32> to vector<32x32xf32>
    %cst_124 = arith.constant dense<0.000000e+00> : vector<8x32xf32>
    %331 = tpu.matmul %303, %330, %cst_124 {dimension_numbers = #tpu.dot_dimension_numbers<[1], [0], [0], [1], [0, 0, 1, 1], [], []>} : vector<8x32xf32>, vector<32x32xf32>, vector<8x32xf32> -> vector<8x32xf32>
    %c7_125 = arith.constant 7 : index
    %c0_126 = arith.constant 0 : index
    %332 = vector.load %arg3[%c7_125, %c0_126] : memref<8x32xf32, #tpu.memory_space<vmem>>, vector<1x32xf32>
    %333 = vector.shape_cast %332 : vector<1x32xf32> to vector<32xf32>
    %334 = vector.shape_cast %333 : vector<32xf32> to vector<1x32xf32>
    %335 = vector.broadcast %328 : vector<8x1xf32> to vector<8x32xf32>
    %336 = vector.broadcast %334 : vector<1x32xf32> to vector<8x32xf32>
    %337 = arith.mulf %335, %336 : vector<8x32xf32>
    %338 = arith.addf %331, %337 : vector<8x32xf32>
    %c7_127 = arith.constant 7 : index
    %c0_128 = arith.constant 0 : index
    %339 = vector.load %arg4[%c7_127, %c0_128] : memref<8x32xf32, #tpu.memory_space<vmem>>, vector<1x32xf32>
    %340 = vector.shape_cast %339 : vector<1x32xf32> to vector<32xf32>
    %341 = vector.shape_cast %340 : vector<32xf32> to vector<1x32xf32>
    %342 = vector.broadcast %341 : vector<1x32xf32> to vector<8x32xf32>
    %343 = arith.addf %338, %342 : vector<8x32xf32>
    %cst_129 = arith.constant 0.000000e+00 : f32
    %344 = vector.broadcast %cst_129 : f32 to vector<8x32xf32>
    %345 = arith.cmpf ogt, %343, %344 : vector<8x32xf32>
    %cst_130 = arith.constant 0.000000e+00 : f32
    %346 = vector.broadcast %cst_130 : f32 to vector<8x32xf32>
    %347 = arith.minimumf %343, %346 : vector<8x32xf32>
    %348 = math.exp %347 : vector<8x32xf32>
    %cst_131 = arith.constant 1.000000e+00 : f32
    %349 = vector.broadcast %cst_131 : f32 to vector<8x32xf32>
    %350 = arith.subf %348, %349 : vector<8x32xf32>
    %351 = arith.select %345, %343, %350 : vector<8x32xi1>, vector<8x32xf32>
    %c7_132 = arith.constant 7 : index
    %c0_133 = arith.constant 0 : index
    %352 = vector.load %arg5[%c7_132, %c0_133] : memref<8x32xf32, #tpu.memory_space<vmem>>, vector<1x32xf32>
    %353 = vector.shape_cast %352 : vector<1x32xf32> to vector<32xf32>
    %354 = vector.shape_cast %353 : vector<32xf32> to vector<1x32xf32>
    %355 = vector.broadcast %354 : vector<1x32xf32> to vector<8x32xf32>
    %356 = arith.mulf %351, %355 : vector<8x32xf32>
    %cst_134 = arith.constant dense<0.000000e+00> : vector<8xf32>
    %357 = vector.multi_reduction <add>, %356, %cst_134 [1] : vector<8x32xf32> to vector<8xf32>
    %358 = vector.shape_cast %357 : vector<8xf32> to vector<8x1xf32>
    %c7_135 = arith.constant 7 : index
    %c0_136 = arith.constant 0 : index
    %359 = vector.load %arg6[%c7_135, %c0_136] : memref<8x1xf32, #tpu.memory_space<vmem>>, vector<1x1xf32>
    %360 = vector.shape_cast %359 : vector<1x1xf32> to vector<1xf32>
    %361 = vector.shape_cast %360 : vector<1xf32> to vector<1x1xf32>
    %362 = vector.broadcast %361 : vector<1x1xf32> to vector<8x1xf32>
    %363 = arith.addf %358, %362 : vector<8x1xf32>
    %cst_137 = arith.constant 0.000000e+00 : f32
    %364 = vector.broadcast %cst_137 : f32 to vector<8x1xf32>
    %365 = arith.subf %364, %363 : vector<8x1xf32>
    %366 = math.exp %365 : vector<8x1xf32>
    %cst_138 = arith.constant 1.000000e+00 : f32
    %367 = vector.broadcast %cst_138 : f32 to vector<8x1xf32>
    %368 = arith.addf %367, %366 : vector<8x1xf32>
    %cst_139 = arith.constant 1.000000e+00 : f32
    %369 = vector.broadcast %cst_139 : f32 to vector<8x1xf32>
    %370 = arith.divf %369, %368 : vector<8x1xf32>
    %c7_i32 = arith.constant 7 : i32
    %371 = vector.broadcast %c7_i32 : i32 to vector<8x8xi32>
    %372 = arith.cmpi eq, %1, %371 : vector<8x8xi32>
    %373 = vector.shape_cast %370 : vector<8x1xf32> to vector<8x1xf32>
    %374 = vector.broadcast %373 : vector<8x1xf32> to vector<8x8xf32>
    %375 = arith.select %372, %374, %327 : vector<8x8xi1>, vector<8x8xf32>
    %c0_140 = arith.constant 0 : index
    %c0_141 = arith.constant 0 : index
    %376 = vector.load %arg7[%c0_140, %c0_141] : memref<8x8xf32, #tpu.memory_space<vmem>>, vector<8x8xf32>
    tpu.vector_store %arg7[%c0_140, %c0_141], %375 {strides = array<i32>} : memref<8x8xf32, #tpu.memory_space<vmem>>, vector<8x8xf32>,
    return
  }
  func.func @transform_0(%arg0: i32) -> (i32, i32) {
    %c0_i32 = arith.constant 0 : i32
    %c0_i32_0 = arith.constant 0 : i32
    %c0_i32_1 = arith.constant 0 : i32
    return %c0_i32, %c0_i32_0 : i32, i32
  }
  func.func @transform_1(%arg0: i32) -> (i32, i32, i32) {
    %c0_i32 = arith.constant 0 : i32
    %c0_i32_0 = arith.constant 0 : i32
    %c0_i32_1 = arith.constant 0 : i32
    %c0_i32_2 = arith.constant 0 : i32
    return %c0_i32, %c0_i32_0, %c0_i32_1 : i32, i32, i32
  }
  func.func @transform_2(%arg0: i32) -> (i32, i32) {
    %c0_i32 = arith.constant 0 : i32
    %c0_i32_0 = arith.constant 0 : i32
    %c0_i32_1 = arith.constant 0 : i32
    return %c0_i32, %c0_i32_0 : i32, i32
  }
  func.func @transform_3(%arg0: i32) -> (i32, i32) {
    %c0_i32 = arith.constant 0 : i32
    %c0_i32_0 = arith.constant 0 : i32
    %c0_i32_1 = arith.constant 0 : i32
    return %c0_i32, %c0_i32_0 : i32, i32
  }
  func.func @transform_4(%arg0: i32) -> (i32, i32) {
    %c0_i32 = arith.constant 0 : i32
    %c0_i32_0 = arith.constant 0 : i32
    %c0_i32_1 = arith.constant 0 : i32
    return %c0_i32, %c0_i32_0 : i32, i32
  }
  func.func @transform_5(%arg0: i32) -> (i32, i32) {
    %c0_i32 = arith.constant 0 : i32
    %c0_i32_0 = arith.constant 0 : i32
    %c0_i32_1 = arith.constant 0 : i32
    return %c0_i32, %c0_i32_0 : i32, i32
  }
  func.func @transform_6(%arg0: i32) -> (i32, i32) {
    %c0_i32 = arith.constant 0 : i32
    %c0_i32_0 = arith.constant 0 : i32
    %c0_i32_1 = arith.constant 0 : i32
    return %c0_i32, %c0_i32_0 : i32, i32
  }
}

</mosaic_0001>

<llo_original>
// kernel: tpu_custom_call.1
$region0: #{tpu_custom_call.1}
  #allocation0 [shape = 'u32[]', space=smem, size = 0x4, offset = 0x4, fixed_abs, tag = 'smem constant byte address 0x4 - core index']
  #allocation1 [shape = 'u32[144,128]{1,0:T(1,128)}', space=vmem, size = 0x12000, scoped, tag = 'internal scratch']
  %s0 = inlined_call_operand.vmem [shape: f32[8,8], index: 0, kind: input, shape index: {}]
  %s1 = inlined_call_operand.hbm [shape: f32[8,32,32], index: 1, kind: input, shape index: {}]
  %s2 = inlined_call_operand.vmem [shape: f32[8,32], index: 2, kind: input, shape index: {}]
  %s3 = inlined_call_operand.hbm [shape: f32[8,32], index: 3, kind: input, shape index: {}]
  %s4 = inlined_call_operand.vmem [shape: f32[8,32], index: 4, kind: input, shape index: {}]
  %s5 = inlined_call_operand.vmem [shape: f32[8,1], index: 5, kind: input, shape index: {}]
  %s6 = inlined_call_operand.hbm [shape: f32[8,8], index: 6, kind: output, shape index: {}]
  %s7 = sld [smem:[#allocation0]]
  $region42: #{tpu_custom_call.1} parent=0
    _
  %s9 = ssub.s32 1, %s7
  %s10 = scalar_select 0, %s9, %s7
  $region1: #{tpu_custom_call.1} parent=0
    #allocation2 [shape = 'u8[131072]{0}', space=vmem, size = 0x20000, scoped, tag = 'input window, operand 1, single buffered']
    #allocation3 [shape = 's32[1]{0}', space=sflag, size = 0x4, scoped, tag = 'scoped memory for tpu_custom_call.1']
    #allocation4 [shape = 's32[1]{0}', space=sflag, size = 0x4, scoped, tag = 'scoped memory for tpu_custom_call.1']
    #allocation5 [shape = 'u8[4096]{0}', space=vmem, size = 0x1000, scoped, tag = 'input window, operand 3, single buffered']
    #allocation6 [shape = 's32[1]{0}', space=sflag, size = 0x4, scoped, tag = 'scoped memory for tpu_custom_call.1']
    #allocation7 [shape = 'u8[4096]{0}', space=vmem, size = 0x1000, scoped, tag = 'output window, operand 0, single buffered']
    %11 = vsyncpa [#allocation3], 0
    %12 = vsyncpa [#allocation6], 0
    %13 = vsyncpa [#allocation4], 0
    // Predicated region
    $region2: #{tpu_custom_call.1} parent=1 // pred_check
      _
    $region3: #{tpu_custom_call.1} parent=1 // pred_check_branch
      %15 = sbr.rel (0) target = $region5
    $region4: #{tpu_custom_call.1} parent=1 // pred_region
      _
    $region5: #{tpu_custom_call.1} parent=1 // pred_fallthru
      _
    // Predicated region
    $region6: #{tpu_custom_call.1} parent=1 // pred_check
      _
    $region7: #{tpu_custom_call.1} parent=1 // pred_check_branch
      %17 = sbr.rel (0) target = $region9
    $region8: #{tpu_custom_call.1} parent=1 // pred_region
      %s19 = ssub.s32 4096, 4096
      %20 = vsyncadd [#allocation3], %s19
      %s21 = sshll.u32 [#allocation2], 4
      %s22 = int_to_ptr.vmem [resolvable:$true] %s21
      %27 = dma.hbm_to_vmem [thread:$0]  %s1, 4096, %s22, [#allocation3], 128, 128, 8
    $region9: #{tpu_custom_call.1} parent=1 // pred_fallthru
      _
    // Predicated region
    $region10: #{tpu_custom_call.1} parent=1 // pred_check
      _
    $region11: #{tpu_custom_call.1} parent=1 // pred_check_branch
      %29 = sbr.rel (0) target = $region13
    $region12: #{tpu_custom_call.1} parent=1 // pred_region
      _
    $region13: #{tpu_custom_call.1} parent=1 // pred_fallthru
      _
    // Predicated region
    $region14: #{tpu_custom_call.1} parent=1 // pred_check
      _
    $region15: #{tpu_custom_call.1} parent=1 // pred_check_branch
      %31 = sbr.rel (0) target = $region17
    $region16: #{tpu_custom_call.1} parent=1 // pred_region
      %s33 = ssub.s32 128, 128
      %34 = vsyncadd [#allocation6], %s33
      %s36 = sshll.u32 [#allocation5], 4
      %s37 = int_to_ptr.vmem [resolvable:$true] %s36
      %39 = dma.hbm_to_vmem [thread:$0]  %s3, 128, %s37, [#allocation6]
    $region17: #{tpu_custom_call.1} parent=1 // pred_fallthru
      _
    // Predicated region
    $region18: #{tpu_custom_call.1} parent=1 // pred_check
      _
    $region19: #{tpu_custom_call.1} parent=1 // pred_check_branch
      %41 = sbr.rel (0) target = $region21
    $region20: #{tpu_custom_call.1} parent=1 // pred_region
      _
    $region21: #{tpu_custom_call.1} parent=1 // pred_fallthru
      _
    // Predicated region
    $region22: #{tpu_custom_call.1} parent=1 // pred_check
      _
    $region23: #{tpu_custom_call.1} parent=1 // pred_check_branch
      %43 = sbr.rel (0) target = $region25
    $region24: #{tpu_custom_call.1} parent=1 // pred_region
      _
    $region25: #{tpu_custom_call.1} parent=1 // pred_fallthru
      _
    // Predicated region
    $region26: #{tpu_custom_call.1} parent=1 // pred_check
      _
    $region27: #{tpu_custom_call.1} parent=1 // pred_check_branch
      %45 = sbr.rel (0) target = $region29
    $region28: #{tpu_custom_call.1} parent=1 // pred_region
      %46 = dma.done [#allocation3], 4096
    $region29: #{tpu_custom_call.1} parent=1 // pred_fallthru
      _
    // Predicated region
    $region30: #{tpu_custom_call.1} parent=1 // pred_check
      _
    $region31: #{tpu_custom_call.1} parent=1 // pred_check_branch
      %48 = sbr.rel (0) target = $region33
    $region32: #{tpu_custom_call.1} parent=1 // pred_region
      %49 = dma.done [#allocation6], 128
    $region33: #{tpu_custom_call.1} parent=1 // pred_fallthru
      _
    %v50 = vld [vmem:[%s0] sm:$0xff]
    %v51 = vlaneseq
    %v52 = vand.u32 %v51, 127
    %v53 = vld [vmem:[#allocation5] sm:$0x1]
    %v54 = vlaneseq
    %v55 = vshrl.u32 %v54, 7
    %v56 = vsub.s32 0, %v55
    %v57 = vrot.slane %v53, %v56
    %vm58 = vcmp.gt.f32.partialorder %v57, 0.0
    %v59 = vmin.f32 %v57, 0.0
    %v60 = vmul.f32 %v59, 1.442695
    %v61 = vpow.pop %v60
    %v62 = vsub.f32 %v61, 1.0
    %v63 = vsel %vm58, %v57, %v62
    %v64 = vld [vmem:[%s4] sm:$0x1]
    %v65 = vlaneseq
    %v66 = vshrl.u32 %v65, 7
    %v67 = vsub.s32 0, %v66
    %v68 = vrot.slane %v64, %v67
    %v69 = vmul.f32 %v63, %v68
    %vm70 = vcmask 261120
    %v71 = vsel %vm70, %v69, 0.0
    %72 = vadd.xlane.f32.xlu0 %v71
    %v73 = vpop.xlane.xlu0 %72
    %v74 = vld [vmem:[%s5] sm:$0x1]
    %v75 = vlaneseq
    %v76 = vshrl.u32 %v75, 7
    %v77 = vsub.s32 0, %v76
    %v78 = vrot.slane %v74, %v77
    %v79 = vadd.f32 %v73, %v78
    %v80 = vsub.f32 0.0, %v79
    %v81 = vmul.f32 %v80, 1.442695
    %v82 = vpow.pop %v81
    %v83 = vadd.f32 %v82, 1.0
    %v84 = vrcp.pop %v83
    %v85 = vmul.f32 1.0, %v84
    %vm86 = vcmp.eq.s32.totalorder %v52, 0
    %88 = vset.pattern.permute.xlu0 0
    %89 = vperm.xlu0 %88, %v85
    %v90 = vpop.permute.xlu0 %89
    %v92 = vsel %vm86, %v90, 0.0
    %s93 = scalar_lea.vmem [#allocation2], 32
    %v94 = vld [vmem:[%s93] sm:$0xff]
    %v95 = vld [vmem:[%s93 + $0x8] sm:$0xff]
    %v96 = vld [vmem:[%s93 + $0x10] sm:$0xff]
    %v97 = vld [vmem:[%s93 + $0x18] sm:$0xff]
    %v98 = vld [vmem:[%s2 + $0x1] sm:$0x1]
    %100 = vset.pattern.permute.xlu0 0
    %101 = vperm.xlu0 %100, %v50
    %v102 = vpop.permute.xlu0 %101
    %v104 = vlaneseq
    %v105 = vshrl.u32 %v104, 7
    %v106 = vsub.s32 0, %v105
    %v107 = vrot.slane %v98, %v106
    %v108 = vmul.f32 %v102, %v107
    %v110 = vsel %vm70, %v63, 0
    %112 = vmatprep.subr.mxu0 0.0
    %113 = vmatpush1.msra.mxu0 %v94
    %114 = vmatprep.subr.mxu0 0.0
    %115 = vmatpush1.msra.mxu0 %v95
    %116 = vmatprep.subr.mxu0 0.0
    %117 = vmatpush1.msra.mxu0 %v96
    %118 = vmatprep.subr.mxu0 0.0
    %119 = vmatpush1.msra.mxu0 %v97
    %120 = vmatprep.subr.mxu0 0.0
    %121 = vmatpush1.msra.mxu0 0.0
    %122 = vmatprep.subr.mxu0 0.0
    %123 = vmatpush1.msra.mxu0 0.0
    %124 = vmatprep.subr.mxu0 0.0
    %125 = vmatpush1.msra.mxu0 0.0
    %126 = vmatprep.subr.mxu0 0.0
    %127 = vmatpush1.msra.mxu0 0.0
    %128 = vmatprep.subr.mxu0 0.0
    %129 = vmatpush1.msra.mxu0 0.0
    %130 = vmatprep.subr.mxu0 0.0
    %131 = vmatpush1.msra.mxu0 0.0
    %132 = vmatprep.subr.mxu0 0.0
    %133 = vmatpush1.msra.mxu0 0.0
    %134 = vmatprep.subr.mxu0 0.0
    %135 = vmatpush1.msra.mxu0 0.0
    %136 = vmatprep.subr.mxu0 0.0
    %137 = vmatpush1.msra.mxu0 0.0
    %138 = vmatprep.subr.mxu0 0.0
    %139 = vmatpush1.msra.mxu0 0.0
    %140 = vmatprep.subr.mxu0 0.0
    %141 = vmatpush1.msra.mxu0 0.0
    %142 = vmatprep.subr.mxu0 0.0
    %143 = vmatpush1.msra.mxu0 0.0
    %144 = vmatprep.subr.mxu0 0.0
    %145 = vmatpush1.msra.mxu0 0.0
    %146 = vmatprep.subr.mxu0 0.0
    %147 = vmatpush1.msra.mxu0 0.0
    %148 = vmatprep.subr.mxu0 0.0
    %149 = vmatpush1.msra.mxu0 0.0
    %150 = vmatprep.subr.mxu0 0.0
    %151 = vmatpush1.msra.mxu0 0.0
    %152 = vmatprep.subr.mxu0 0.0
    %153 = vmatpush1.msra.mxu0 0.0
    %154 = vmatprep.subr.mxu0 0.0
    %155 = vmatpush1.msra.mxu0 0.0
    %156 = vmatprep.subr.mxu0 0.0
    %157 = vmatpush1.msra.mxu0 0.0
    %158 = vmatprep.subr.mxu0 0.0
    %159 = vmatpush1.msra.mxu0 0.0
    %160 = vmatprep.subr.mxu0 0.0
    %161 = vmatpush1.msra.mxu0 0.0
    %162 = vmatprep.subr.mxu0 0.0
    %163 = vmatpush1.msra.mxu0 0.0
    %164 = vmatprep.subr.mxu0 0.0
    %165 = vmatpush1.msra.mxu0 0.0
    %166 = vmatprep.subr.mxu0 0.0
    %167 = vmatpush1.msra.mxu0 0.0
    %168 = vmatprep.subr.mxu0 0.0
    %169 = vmatpush1.msra.mxu0 0.0
    %170 = vmatprep.subr.mxu0 0.0
    %171 = vmatpush1.msra.mxu0 0.0
    %172 = vmatprep.subr.mxu0 0.0
    %173 = vmatpush1.msra.mxu0 0.0
    %174 = vmatprep.subr.mxu0 0.0
    %175 = vmatpush1.msra.mxu0 0.0
    %176 = vmatprep.mubr.f32.mxu0 0.0
    %177 = vmatmul.mubr.f32.gmra.mrb[0].mxu0 %v110
    %v178 = vpop.f32.mrb[0].mxu0
    %v179 = vadd.f32 %v108, %v178
    %v180 = vpop.f32.mrb[0].mxu0
    %181 = vdwg.mxu0
    %v182 = vld [vmem:[#allocation5 + $0x1] sm:$0x1]
    %v183 = vlaneseq
    %v184 = vshrl.u32 %v183, 7
    %v185 = vsub.s32 0, %v184
    %v186 = vrot.slane %v182, %v185
    %v187 = vadd.f32 %v179, %v186
    %vm188 = vcmp.gt.f32.partialorder %v187, 0.0
    %v189 = vmin.f32 %v187, 0.0
    %v190 = vmul.f32 %v189, 1.442695
    %v191 = vpow.pop %v190
    %v192 = vsub.f32 %v191, 1.0
    %v193 = vsel %vm188, %v187, %v192
    %v194 = vld [vmem:[%s4 + $0x1] sm:$0x1]
    %v195 = vlaneseq
    %v196 = vshrl.u32 %v195, 7
    %v197 = vsub.s32 0, %v196
    %v198 = vrot.slane %v194, %v197
    %v199 = vmul.f32 %v193, %v198
    %v200 = vsel %vm70, %v199, 0.0
    %201 = vadd.xlane.f32.xlu0 %v200
    %v202 = vpop.xlane.xlu0 %201
    %v203 = vld [vmem:[%s5 + $0x1] sm:$0x1]
    %v204 = vlaneseq
    %v205 = vshrl.u32 %v204, 7
    %v206 = vsub.s32 0, %v205
    %v207 = vrot.slane %v203, %v206
    %v208 = vadd.f32 %v202, %v207
    %v209 = vsub.f32 0.0, %v208
    %v210 = vmul.f32 %v209, 1.442695
    %v211 = vpow.pop %v210
    %v212 = vadd.f32 %v211, 1.0
    %v213 = vrcp.pop %v212
    %v214 = vmul.f32 1.0, %v213
    %vm215 = vcmp.eq.s32.totalorder %v52, 1
    %217 = vset.pattern.permute.xlu0 0
    %218 = vperm.xlu0 %217, %v214
    %v219 = vpop.permute.xlu0 %218
    %v221 = vsel %vm215, %v219, %v92
    %s222 = scalar_lea.vmem [#allocation2], 64
    %v223 = vld [vmem:[%s222] sm:$0xff]
    %v224 = vld [vmem:[%s222 + $0x8] sm:$0xff]
    %v225 = vld [vmem:[%s222 + $0x10] sm:$0xff]
    %v226 = vld [vmem:[%s222 + $0x18] sm:$0xff]
    %v227 = vld [vmem:[%s2 + $0x2] sm:$0x1]
    %228 = vset.pattern.permute.xlu0 1
    %229 = vperm.xlu0 %228, %v50
    %v230 = vpop.permute.xlu0 %229
    %v232 = vlaneseq
    %v233 = vshrl.u32 %v232, 7
    %v234 = vsub.s32 0, %v233
    %v235 = vrot.slane %v227, %v234
    %v236 = vmul.f32 %v230, %v235
    %v238 = vsel %vm70, %v193, 0
    %240 = vmatprep.subr.mxu0 0.0
    %241 = vmatpush1.msra.mxu0 %v223
    %242 = vmatprep.subr.mxu0 0.0
    %243 = vmatpush1.msra.mxu0 %v224
    %244 = vmatprep.subr.mxu0 0.0
    %245 = vmatpush1.msra.mxu0 %v225
    %246 = vmatprep.subr.mxu0 0.0
    %247 = vmatpush1.msra.mxu0 %v226
    %248 = vmatprep.subr.mxu0 0.0
    %249 = vmatpush1.msra.mxu0 0.0
    %250 = vmatprep.subr.mxu0 0.0
    %251 = vmatpush1.msra.mxu0 0.0
    %252 = vmatprep.subr.mxu0 0.0
    %253 = vmatpush1.msra.mxu0 0.0
    %254 = vmatprep.subr.mxu0 0.0
    %255 = vmatpush1.msra.mxu0 0.0
    %256 = vmatprep.subr.mxu0 0.0
    %257 = vmatpush1.msra.mxu0 0.0
    %258 = vmatprep.subr.mxu0 0.0
    %259 = vmatpush1.msra.mxu0 0.0
    %260 = vmatprep.subr.mxu0 0.0
    %261 = vmatpush1.msra.mxu0 0.0
    %262 = vmatprep.subr.mxu0 0.0
    %263 = vmatpush1.msra.mxu0 0.0
    %264 = vmatprep.subr.mxu0 0.0
    %265 = vmatpush1.msra.mxu0 0.0
    %266 = vmatprep.subr.mxu0 0.0
    %267 = vmatpush1.msra.mxu0 0.0
    %268 = vmatprep.subr.mxu0 0.0
    %269 = vmatpush1.msra.mxu0 0.0
    %270 = vmatprep.subr.mxu0 0.0
    %271 = vmatpush1.msra.mxu0 0.0
    %272 = vmatprep.subr.mxu0 0.0
    %273 = vmatpush1.msra.mxu0 0.0
    %274 = vmatprep.subr.mxu0 0.0
    %275 = vmatpush1.msra.mxu0 0.0
    %276 = vmatprep.subr.mxu0 0.0
    %277 = vmatpush1.msra.mxu0 0.0
    %278 = vmatprep.subr.mxu0 0.0
    %279 = vmatpush1.msra.mxu0 0.0
    %280 = vmatprep.subr.mxu0 0.0
    %281 = vmatpush1.msra.mxu0 0.0
    %282 = vmatprep.subr.mxu0 0.0
    %283 = vmatpush1.msra.mxu0 0.0
    %284 = vmatprep.subr.mxu0 0.0
    %285 = vmatpush1.msra.mxu0 0.0
    %286 = vmatprep.subr.mxu0 0.0
    %287 = vmatpush1.msra.mxu0 0.0
    %288 = vmatprep.subr.mxu0 0.0
    %289 = vmatpush1.msra.mxu0 0.0
    %290 = vmatprep.subr.mxu0 0.0
    %291 = vmatpush1.msra.mxu0 0.0
    %292 = vmatprep.subr.mxu0 0.0
    %293 = vmatpush1.msra.mxu0 0.0
    %294 = vmatprep.subr.mxu0 0.0
    %295 = vmatpush1.msra.mxu0 0.0
    %296 = vmatprep.subr.mxu0 0.0
    %297 = vmatpush1.msra.mxu0 0.0
    %298 = vmatprep.subr.mxu0 0.0
    %299 = vmatpush1.msra.mxu0 0.0
    %300 = vmatprep.subr.mxu0 0.0
    %301 = vmatpush1.msra.mxu0 0.0
    %302 = vmatprep.subr.mxu0 0.0
    %303 = vmatpush1.msra.mxu0 0.0
    %304 = vmatprep.mubr.f32.mxu0 0.0
    %305 = vmatmul.mubr.f32.gmra.mrb[0].mxu0 %v238
    %v306 = vpop.f32.mrb[0].mxu0
    %v307 = vadd.f32 %v236, %v306
    %v308 = vpop.f32.mrb[0].mxu0
    %309 = vdwg.mxu0
    %v310 = vld [vmem:[#allocation5 + $0x2] sm:$0x1]
    %v311 = vlaneseq
    %v312 = vshrl.u32 %v311, 7
    %v313 = vsub.s32 0, %v312
    %v314 = vrot.slane %v310, %v313
    %v315 = vadd.f32 %v307, %v314
    %vm316 = vcmp.gt.f32.partialorder %v315, 0.0
    %v317 = vmin.f32 %v315, 0.0
    %v318 = vmul.f32 %v317, 1.442695
    %v319 = vpow.pop %v318
    %v320 = vsub.f32 %v319, 1.0
    %v321 = vsel %vm316, %v315, %v320
    %v322 = vld [vmem:[%s4 + $0x2] sm:$0x1]
    %v323 = vlaneseq
    %v324 = vshrl.u32 %v323, 7
    %v325 = vsub.s32 0, %v324
    %v326 = vrot.slane %v322, %v325
    %v327 = vmul.f32 %v321, %v326
    %v328 = vsel %vm70, %v327, 0.0
    %329 = vadd.xlane.f32.xlu0 %v328
    %v330 = vpop.xlane.xlu0 %329
    %v331 = vld [vmem:[%s5 + $0x2] sm:$0x1]
    %v332 = vlaneseq
    %v333 = vshrl.u32 %v332, 7
    %v334 = vsub.s32 0, %v333
    %v335 = vrot.slane %v331, %v334
    %v336 = vadd.f32 %v330, %v335
    %v337 = vsub.f32 0.0, %v336
    %v338 = vmul.f32 %v337, 1.442695
    %v339 = vpow.pop %v338
    %v340 = vadd.f32 %v339, 1.0
    %v341 = vrcp.pop %v340
    %v342 = vmul.f32 1.0, %v341
    %vm343 = vcmp.eq.s32.totalorder %v52, 2
    %345 = vset.pattern.permute.xlu0 0
    %346 = vperm.xlu0 %345, %v342
    %v347 = vpop.permute.xlu0 %346
    %v349 = vsel %vm343, %v347, %v221
    %s350 = scalar_lea.vmem [#allocation2], 96
    %v351 = vld [vmem:[%s350] sm:$0xff]
    %v352 = vld [vmem:[%s350 + $0x8] sm:$0xff]
    %v353 = vld [vmem:[%s350 + $0x10] sm:$0xff]
    %v354 = vld [vmem:[%s350 + $0x18] sm:$0xff]
    %v355 = vld [vmem:[%s2 + $0x3] sm:$0x1]
    %356 = vset.pattern.permute.xlu0 2
    %357 = vperm.xlu0 %356, %v50
    %v358 = vpop.permute.xlu0 %357
    %v360 = vlaneseq
    %v361 = vshrl.u32 %v360, 7
    %v362 = vsub.s32 0, %v361
    %v363 = vrot.slane %v355, %v362
    %v364 = vmul.f32 %v358, %v363
    %v366 = vsel %vm70, %v321, 0
    %368 = vmatprep.subr.mxu0 0.0
    %369 = vmatpush1.msra.mxu0 %v351
    %370 = vmatprep.subr.mxu0 0.0
    %371 = vmatpush1.msra.mxu0 %v352
    %372 = vmatprep.subr.mxu0 0.0
    %373 = vmatpush1.msra.mxu0 %v353
    %374 = vmatprep.subr.mxu0 0.0
    %375 = vmatpush1.msra.mxu0 %v354
    %376 = vmatprep.subr.mxu0 0.0
    %377 = vmatpush1.msra.mxu0 0.0
    %378 = vmatprep.subr.mxu0 0.0
    %379 = vmatpush1.msra.mxu0 0.0
    %380 = vmatprep.subr.mxu0 0.0
    %381 = vmatpush1.msra.mxu0 0.0
    %382 = vmatprep.subr.mxu0 0.0
    %383 = vmatpush1.msra.mxu0 0.0
    %384 = vmatprep.subr.mxu0 0.0
    %385 = vmatpush1.msra.mxu0 0.0
    %386 = vmatprep.subr.mxu0 0.0
    %387 = vmatpush1.msra.mxu0 0.0
    %388 = vmatprep.subr.mxu0 0.0
    %389 = vmatpush1.msra.mxu0 0.0
    %390 = vmatprep.subr.mxu0 0.0
    %391 = vmatpush1.msra.mxu0 0.0
    %392 = vmatprep.subr.mxu0 0.0
    %393 = vmatpush1.msra.mxu0 0.0
    %394 = vmatprep.subr.mxu0 0.0
    %395 = vmatpush1.msra.mxu0 0.0
    %396 = vmatprep.subr.mxu0 0.0
    %397 = vmatpush1.msra.mxu0 0.0
    %398 = vmatprep.subr.mxu0 0.0
    %399 = vmatpush1.msra.mxu0 0.0
    %400 = vmatprep.subr.mxu0 0.0
    %401 = vmatpush1.msra.mxu0 0.0
    %402 = vmatprep.subr.mxu0 0.0
    %403 = vmatpush1.msra.mxu0 0.0
    %404 = vmatprep.subr.mxu0 0.0
    %405 = vmatpush1.msra.mxu0 0.0
    %406 = vmatprep.subr.mxu0 0.0
    %407 = vmatpush1.msra.mxu0 0.0
    %408 = vmatprep.subr.mxu0 0.0
    %409 = vmatpush1.msra.mxu0 0.0
    %410 = vmatprep.subr.mxu0 0.0
    %411 = vmatpush1.msra.mxu0 0.0
    %412 = vmatprep.subr.mxu0 0.0
    %413 = vmatpush1.msra.mxu0 0.0
    %414 = vmatprep.subr.mxu0 0.0
    %415 = vmatpush1.msra.mxu0 0.0
    %416 = vmatprep.subr.mxu0 0.0
    %417 = vmatpush1.msra.mxu0 0.0
    %418 = vmatprep.subr.mxu0 0.0
    %419 = vmatpush1.msra.mxu0 0.0
    %420 = vmatprep.subr.mxu0 0.0
    %421 = vmatpush1.msra.mxu0 0.0
    %422 = vmatprep.subr.mxu0 0.0
    %423 = vmatpush1.msra.mxu0 0.0
    %424 = vmatprep.subr.mxu0 0.0
    %425 = vmatpush1.msra.mxu0 0.0
    %426 = vmatprep.subr.mxu0 0.0
    %427 = vmatpush1.msra.mxu0 0.0
    %428 = vmatprep.subr.mxu0 0.0
    %429 = vmatpush1.msra.mxu0 0.0
    %430 = vmatprep.subr.mxu0 0.0
    %431 = vmatpush1.msra.mxu0 0.0
    %432 = vmatprep.mubr.f32.mxu0 0.0
    %433 = vmatmul.mubr.f32.gmra.mrb[0].mxu0 %v366
    %v434 = vpop.f32.mrb[0].mxu0
    %v435 = vadd.f32 %v364, %v434
    %v436 = vpop.f32.mrb[0].mxu0
    %437 = vdwg.mxu0
    %v438 = vld [vmem:[#allocation5 + $0x3] sm:$0x1]
    %v439 = vlaneseq
    %v440 = vshrl.u32 %v439, 7
    %v441 = vsub.s32 0, %v440
    %v442 = vrot.slane %v438, %v441
    %v443 = vadd.f32 %v435, %v442
    %vm444 = vcmp.gt.f32.partialorder %v443, 0.0
    %v445 = vmin.f32 %v443, 0.0
    %v446 = vmul.f32 %v445, 1.442695
    %v447 = vpow.pop %v446
    %v448 = vsub.f32 %v447, 1.0
    %v449 = vsel %vm444, %v443, %v448
    %v450 = vld [vmem:[%s4 + $0x3] sm:$0x1]
    %v451 = vlaneseq
    %v452 = vshrl.u32 %v451, 7
    %v453 = vsub.s32 0, %v452
    %v454 = vrot.slane %v450, %v453
    %v455 = vmul.f32 %v449, %v454
    %v456 = vsel %vm70, %v455, 0.0
    %457 = vadd.xlane.f32.xlu0 %v456
    %v458 = vpop.xlane.xlu0 %457
    %v459 = vld [vmem:[%s5 + $0x3] sm:$0x1]
    %v460 = vlaneseq
    %v461 = vshrl.u32 %v460, 7
    %v462 = vsub.s32 0, %v461
    %v463 = vrot.slane %v459, %v462
    %v464 = vadd.f32 %v458, %v463
    %v465 = vsub.f32 0.0, %v464
    %v466 = vmul.f32 %v465, 1.442695
    %v467 = vpow.pop %v466
    %v468 = vadd.f32 %v467, 1.0
    %v469 = vrcp.pop %v468
    %v470 = vmul.f32 1.0, %v469
    %vm471 = vcmp.eq.s32.totalorder %v52, 3
    %473 = vset.pattern.permute.xlu0 0
    %474 = vperm.xlu0 %473, %v470
    %v475 = vpop.permute.xlu0 %474
    %v477 = vsel %vm471, %v475, %v349
    %s478 = scalar_lea.vmem [#allocation2], 128
    %v479 = vld [vmem:[%s478] sm:$0xff]
    %v480 = vld [vmem:[%s478 + $0x8] sm:$0xff]
    %v481 = vld [vmem:[%s478 + $0x10] sm:$0xff]
    %v482 = vld [vmem:[%s478 + $0x18] sm:$0xff]
    %v483 = vld [vmem:[%s2 + $0x4] sm:$0x1]
    %484 = vset.pattern.permute.xlu0 3
    %485 = vperm.xlu0 %484, %v50
    %v486 = vpop.permute.xlu0 %485
    %v488 = vlaneseq
    %v489 = vshrl.u32 %v488, 7
    %v490 = vsub.s32 0, %v489
    %v491 = vrot.slane %v483, %v490
    %v492 = vmul.f32 %v486, %v491
    %v494 = vsel %vm70, %v449, 0
    %496 = vmatprep.subr.mxu0 0.0
    %497 = vmatpush1.msra.mxu0 %v479
    %498 = vmatprep.subr.mxu0 0.0
    %499 = vmatpush1.msra.mxu0 %v480
    %500 = vmatprep.subr.mxu0 0.0
    %501 = vmatpush1.msra.mxu0 %v481
    %502 = vmatprep.subr.mxu0 0.0
    %503 = vmatpush1.msra.mxu0 %v482
    %504 = vmatprep.subr.mxu0 0.0
    %505 = vmatpush1.msra.mxu0 0.0
    %506 = vmatprep.subr.mxu0 0.0
    %507 = vmatpush1.msra.mxu0 0.0
    %508 = vmatprep.subr.mxu0 0.0
    %509 = vmatpush1.msra.mxu0 0.0
    %510 = vmatprep.subr.mxu0 0.0
    %511 = vmatpush1.msra.mxu0 0.0
    %512 = vmatprep.subr.mxu0 0.0
    %513 = vmatpush1.msra.mxu0 0.0
    %514 = vmatprep.subr.mxu0 0.0
    %515 = vmatpush1.msra.mxu0 0.0
    %516 = vmatprep.subr.mxu0 0.0
    %517 = vmatpush1.msra.mxu0 0.0
    %518 = vmatprep.subr.mxu0 0.0
    %519 = vmatpush1.msra.mxu0 0.0
    %520 = vmatprep.subr.mxu0 0.0
    %521 = vmatpush1.msra.mxu0 0.0
    %522 = vmatprep.subr.mxu0 0.0
    %523 = vmatpush1.msra.mxu0 0.0
    %524 = vmatprep.subr.mxu0 0.0
    %525 = vmatpush1.msra.mxu0 0.0
    %526 = vmatprep.subr.mxu0 0.0
    %527 = vmatpush1.msra.mxu0 0.0
    %528 = vmatprep.subr.mxu0 0.0
    %529 = vmatpush1.msra.mxu0 0.0
    %530 = vmatprep.subr.mxu0 0.0
    %531 = vmatpush1.msra.mxu0 0.0
    %532 = vmatprep.subr.mxu0 0.0
    %533 = vmatpush1.msra.mxu0 0.0
    %534 = vmatprep.subr.mxu0 0.0
    %535 = vmatpush1.msra.mxu0 0.0
    %536 = vmatprep.subr.mxu0 0.0
    %537 = vmatpush1.msra.mxu0 0.0
    %538 = vmatprep.subr.mxu0 0.0
    %539 = vmatpush1.msra.mxu0 0.0
    %540 = vmatprep.subr.mxu0 0.0
    %541 = vmatpush1.msra.mxu0 0.0
    %542 = vmatprep.subr.mxu0 0.0
    %543 = vmatpush1.msra.mxu0 0.0
    %544 = vmatprep.subr.mxu0 0.0
    %545 = vmatpush1.msra.mxu0 0.0
    %546 = vmatprep.subr.mxu0 0.0
    %547 = vmatpush1.msra.mxu0 0.0
    %548 = vmatprep.subr.mxu0 0.0
    %549 = vmatpush1.msra.mxu0 0.0
    %550 = vmatprep.subr.mxu0 0.0
    %551 = vmatpush1.msra.mxu0 0.0
    %552 = vmatprep.subr.mxu0 0.0
    %553 = vmatpush1.msra.mxu0 0.0
    %554 = vmatprep.subr.mxu0 0.0
    %555 = vmatpush1.msra.mxu0 0.0
    %556 = vmatprep.subr.mxu0 0.0
    %557 = vmatpush1.msra.mxu0 0.0
    %558 = vmatprep.subr.mxu0 0.0
    %559 = vmatpush1.msra.mxu0 0.0
    %560 = vmatprep.mubr.f32.mxu0 0.0
    %561 = vmatmul.mubr.f32.gmra.mrb[0].mxu0 %v494
    %v562 = vpop.f32.mrb[0].mxu0
    %v563 = vadd.f32 %v492, %v562
    %v564 = vpop.f32.mrb[0].mxu0
    %565 = vdwg.mxu0
    %v566 = vld [vmem:[#allocation5 + $0x4] sm:$0x1]
    %v567 = vlaneseq
    %v568 = vshrl.u32 %v567, 7
    %v569 = vsub.s32 0, %v568
    %v570 = vrot.slane %v566, %v569
    %v571 = vadd.f32 %v563, %v570
    %vm572 = vcmp.gt.f32.partialorder %v571, 0.0
    %v573 = vmin.f32 %v571, 0.0
    %v574 = vmul.f32 %v573, 1.442695
    %v575 = vpow.pop %v574
    %v576 = vsub.f32 %v575, 1.0
    %v577 = vsel %vm572, %v571, %v576
    %v578 = vld [vmem:[%s4 + $0x4] sm:$0x1]
    %v579 = vlaneseq
    %v580 = vshrl.u32 %v579, 7
    %v581 = vsub.s32 0, %v580
    %v582 = vrot.slane %v578, %v581
    %v583 = vmul.f32 %v577, %v582
    %v584 = vsel %vm70, %v583, 0.0
    %585 = vadd.xlane.f32.xlu0 %v584
    %v586 = vpop.xlane.xlu0 %585
    %v587 = vld [vmem:[%s5 + $0x4] sm:$0x1]
    %v588 = vlaneseq
    %v589 = vshrl.u32 %v588, 7
    %v590 = vsub.s32 0, %v589
    %v591 = vrot.slane %v587, %v590
    %v592 = vadd.f32 %v586, %v591
    %v593 = vsub.f32 0.0, %v592
    %v594 = vmul.f32 %v593, 1.442695
    %v595 = vpow.pop %v594
    %v596 = vadd.f32 %v595, 1.0
    %v597 = vrcp.pop %v596
    %v598 = vmul.f32 1.0, %v597
    %vm599 = vcmp.eq.s32.totalorder %v52, 4
    %601 = vset.pattern.permute.xlu0 0
    %602 = vperm.xlu0 %601, %v598
    %v603 = vpop.permute.xlu0 %602
    %v605 = vsel %vm599, %v603, %v477
    %s606 = scalar_lea.vmem [#allocation2], 160
    %v607 = vld [vmem:[%s606] sm:$0xff]
    %v608 = vld [vmem:[%s606 + $0x8] sm:$0xff]
    %v609 = vld [vmem:[%s606 + $0x10] sm:$0xff]
    %v610 = vld [vmem:[%s606 + $0x18] sm:$0xff]
    %v611 = vld [vmem:[%s2 + $0x5] sm:$0x1]
    %612 = vset.pattern.permute.xlu0 4
    %613 = vperm.xlu0 %612, %v50
    %v614 = vpop.permute.xlu0 %613
    %v616 = vlaneseq
    %v617 = vshrl.u32 %v616, 7
    %v618 = vsub.s32 0, %v617
    %v619 = vrot.slane %v611, %v618
    %v620 = vmul.f32 %v614, %v619
    %v622 = vsel %vm70, %v577, 0
    %624 = vmatprep.subr.mxu0 0.0
    %625 = vmatpush1.msra.mxu0 %v607
    %626 = vmatprep.subr.mxu0 0.0
    %627 = vmatpush1.msra.mxu0 %v608
    %628 = vmatprep.subr.mxu0 0.0
    %629 = vmatpush1.msra.mxu0 %v609
    %630 = vmatprep.subr.mxu0 0.0
    %631 = vmatpush1.msra.mxu0 %v610
    %632 = vmatprep.subr.mxu0 0.0
    %633 = vmatpush1.msra.mxu0 0.0
    %634 = vmatprep.subr.mxu0 0.0
    %635 = vmatpush1.msra.mxu0 0.0
    %636 = vmatprep.subr.mxu0 0.0
    %637 = vmatpush1.msra.mxu0 0.0
    %638 = vmatprep.subr.mxu0 0.0
    %639 = vmatpush1.msra.mxu0 0.0
    %640 = vmatprep.subr.mxu0 0.0
    %641 = vmatpush1.msra.mxu0 0.0
    %642 = vmatprep.subr.mxu0 0.0
    %643 = vmatpush1.msra.mxu0 0.0
    %644 = vmatprep.subr.mxu0 0.0
    %645 = vmatpush1.msra.mxu0 0.0
    %646 = vmatprep.subr.mxu0 0.0
    %647 = vmatpush1.msra.mxu0 0.0
    %648 = vmatprep.subr.mxu0 0.0
    %649 = vmatpush1.msra.mxu0 0.0
    %650 = vmatprep.subr.mxu0 0.0
    %651 = vmatpush1.msra.mxu0 0.0
    %652 = vmatprep.subr.mxu0 0.0
    %653 = vmatpush1.msra.mxu0 0.0
    %654 = vmatprep.subr.mxu0 0.0
    %655 = vmatpush1.msra.mxu0 0.0
    %656 = vmatprep.subr.mxu0 0.0
    %657 = vmatpush1.msra.mxu0 0.0
    %658 = vmatprep.subr.mxu0 0.0
    %659 = vmatpush1.msra.mxu0 0.0
    %660 = vmatprep.subr.mxu0 0.0
    %661 = vmatpush1.msra.mxu0 0.0
    %662 = vmatprep.subr.mxu0 0.0
    %663 = vmatpush1.msra.mxu0 0.0
    %664 = vmatprep.subr.mxu0 0.0
    %665 = vmatpush1.msra.mxu0 0.0
    %666 = vmatprep.subr.mxu0 0.0
    %667 = vmatpush1.msra.mxu0 0.0
    %668 = vmatprep.subr.mxu0 0.0
    %669 = vmatpush1.msra.mxu0 0.0
    %670 = vmatprep.subr.mxu0 0.0
    %671 = vmatpush1.msra.mxu0 0.0
    %672 = vmatprep.subr.mxu0 0.0
    %673 = vmatpush1.msra.mxu0 0.0
    %674 = vmatprep.subr.mxu0 0.0
    %675 = vmatpush1.msra.mxu0 0.0
    %676 = vmatprep.subr.mxu0 0.0
    %677 = vmatpush1.msra.mxu0 0.0
    %678 = vmatprep.subr.mxu0 0.0
    %679 = vmatpush1.msra.mxu0 0.0
    %680 = vmatprep.subr.mxu0 0.0
    %681 = vmatpush1.msra.mxu0 0.0
    %682 = vmatprep.subr.mxu0 0.0
    %683 = vmatpush1.msra.mxu0 0.0
    %684 = vmatprep.subr.mxu0 0.0
    %685 = vmatpush1.msra.mxu0 0.0
    %686 = vmatprep.subr.mxu0 0.0
    %687 = vmatpush1.msra.mxu0 0.0
    %688 = vmatprep.mubr.f32.mxu0 0.0
    %689 = vmatmul.mubr.f32.gmra.mrb[0].mxu0 %v622
    %v690 = vpop.f32.mrb[0].mxu0
    %v691 = vadd.f32 %v620, %v690
    %v692 = vpop.f32.mrb[0].mxu0
    %693 = vdwg.mxu0
    %v694 = vld [vmem:[#allocation5 + $0x5] sm:$0x1]
    %v695 = vlaneseq
    %v696 = vshrl.u32 %v695, 7
    %v697 = vsub.s32 0, %v696
    %v698 = vrot.slane %v694, %v697
    %v699 = vadd.f32 %v691, %v698
    %vm700 = vcmp.gt.f32.partialorder %v699, 0.0
    %v701 = vmin.f32 %v699, 0.0
    %v702 = vmul.f32 %v701, 1.442695
    %v703 = vpow.pop %v702
    %v704 = vsub.f32 %v703, 1.0
    %v705 = vsel %vm700, %v699, %v704
    %v706 = vld [vmem:[%s4 + $0x5] sm:$0x1]
    %v707 = vlaneseq
    %v708 = vshrl.u32 %v707, 7
    %v709 = vsub.s32 0, %v708
    %v710 = vrot.slane %v706, %v709
    %v711 = vmul.f32 %v705, %v710
    %v712 = vsel %vm70, %v711, 0.0
    %713 = vadd.xlane.f32.xlu0 %v712
    %v714 = vpop.xlane.xlu0 %713
    %v715 = vld [vmem:[%s5 + $0x5] sm:$0x1]
    %v716 = vlaneseq
    %v717 = vshrl.u32 %v716, 7
    %v718 = vsub.s32 0, %v717
    %v719 = vrot.slane %v715, %v718
    %v720 = vadd.f32 %v714, %v719
    %v721 = vsub.f32 0.0, %v720
    %v722 = vmul.f32 %v721, 1.442695
    %v723 = vpow.pop %v722
    %v724 = vadd.f32 %v723, 1.0
    %v725 = vrcp.pop %v724
    %v726 = vmul.f32 1.0, %v725
    %vm727 = vcmp.eq.s32.totalorder %v52, 5
    %729 = vset.pattern.permute.xlu0 0
    %730 = vperm.xlu0 %729, %v726
    %v731 = vpop.permute.xlu0 %730
    %v733 = vsel %vm727, %v731, %v605
    %s734 = scalar_lea.vmem [#allocation2], 192
    %v735 = vld [vmem:[%s734] sm:$0xff]
    %v736 = vld [vmem:[%s734 + $0x8] sm:$0xff]
    %v737 = vld [vmem:[%s734 + $0x10] sm:$0xff]
    %v738 = vld [vmem:[%s734 + $0x18] sm:$0xff]
    %v739 = vld [vmem:[%s2 + $0x6] sm:$0x1]
    %740 = vset.pattern.permute.xlu0 5
    %741 = vperm.xlu0 %740, %v50
    %v742 = vpop.permute.xlu0 %741
    %v744 = vlaneseq
    %v745 = vshrl.u32 %v744, 7
    %v746 = vsub.s32 0, %v745
    %v747 = vrot.slane %v739, %v746
    %v748 = vmul.f32 %v742, %v747
    %v750 = vsel %vm70, %v705, 0
    %752 = vmatprep.subr.mxu0 0.0
    %753 = vmatpush1.msra.mxu0 %v735
    %754 = vmatprep.subr.mxu0 0.0
    %755 = vmatpush1.msra.mxu0 %v736
    %756 = vmatprep.subr.mxu0 0.0
    %757 = vmatpush1.msra.mxu0 %v737
    %758 = vmatprep.subr.mxu0 0.0
    %759 = vmatpush1.msra.mxu0 %v738
    %760 = vmatprep.subr.mxu0 0.0
    %761 = vmatpush1.msra.mxu0 0.0
    %762 = vmatprep.subr.mxu0 0.0
    %763 = vmatpush1.msra.mxu0 0.0
    %764 = vmatprep.subr.mxu0 0.0
    %765 = vmatpush1.msra.mxu0 0.0
    %766 = vmatprep.subr.mxu0 0.0
    %767 = vmatpush1.msra.mxu0 0.0
    %768 = vmatprep.subr.mxu0 0.0
    %769 = vmatpush1.msra.mxu0 0.0
    %770 = vmatprep.subr.mxu0 0.0
    %771 = vmatpush1.msra.mxu0 0.0
    %772 = vmatprep.subr.mxu0 0.0
    %773 = vmatpush1.msra.mxu0 0.0
    %774 = vmatprep.subr.mxu0 0.0
    %775 = vmatpush1.msra.mxu0 0.0
    %776 = vmatprep.subr.mxu0 0.0
    %777 = vmatpush1.msra.mxu0 0.0
    %778 = vmatprep.subr.mxu0 0.0
    %779 = vmatpush1.msra.mxu0 0.0
    %780 = vmatprep.subr.mxu0 0.0
    %781 = vmatpush1.msra.mxu0 0.0
    %782 = vmatprep.subr.mxu0 0.0
    %783 = vmatpush1.msra.mxu0 0.0
    %784 = vmatprep.subr.mxu0 0.0
    %785 = vmatpush1.msra.mxu0 0.0
    %786 = vmatprep.subr.mxu0 0.0
    %787 = vmatpush1.msra.mxu0 0.0
    %788 = vmatprep.subr.mxu0 0.0
    %789 = vmatpush1.msra.mxu0 0.0
    %790 = vmatprep.subr.mxu0 0.0
    %791 = vmatpush1.msra.mxu0 0.0
    %792 = vmatprep.subr.mxu0 0.0
    %793 = vmatpush1.msra.mxu0 0.0
    %794 = vmatprep.subr.mxu0 0.0
    %795 = vmatpush1.msra.mxu0 0.0
    %796 = vmatprep.subr.mxu0 0.0
    %797 = vmatpush1.msra.mxu0 0.0
    %798 = vmatprep.subr.mxu0 0.0
    %799 = vmatpush1.msra.mxu0 0.0
    %800 = vmatprep.subr.mxu0 0.0
    %801 = vmatpush1.msra.mxu0 0.0
    %802 = vmatprep.subr.mxu0 0.0
    %803 = vmatpush1.msra.mxu0 0.0
    %804 = vmatprep.subr.mxu0 0.0
    %805 = vmatpush1.msra.mxu0 0.0
    %806 = vmatprep.subr.mxu0 0.0
    %807 = vmatpush1.msra.mxu0 0.0
    %808 = vmatprep.subr.mxu0 0.0
    %809 = vmatpush1.msra.mxu0 0.0
    %810 = vmatprep.subr.mxu0 0.0
    %811 = vmatpush1.msra.mxu0 0.0
    %812 = vmatprep.subr.mxu0 0.0
    %813 = vmatpush1.msra.mxu0 0.0
    %814 = vmatprep.subr.mxu0 0.0
    %815 = vmatpush1.msra.mxu0 0.0
    %816 = vmatprep.mubr.f32.mxu0 0.0
    %817 = vmatmul.mubr.f32.gmra.mrb[0].mxu0 %v750
    %v818 = vpop.f32.mrb[0].mxu0
    %v819 = vadd.f32 %v748, %v818
    %v820 = vpop.f32.mrb[0].mxu0
    %821 = vdwg.mxu0
    %v822 = vld [vmem:[#allocation5 + $0x6] sm:$0x1]
    %v823 = vlaneseq
    %v824 = vshrl.u32 %v823, 7
    %v825 = vsub.s32 0, %v824
    %v826 = vrot.slane %v822, %v825
    %v827 = vadd.f32 %v819, %v826
    %vm828 = vcmp.gt.f32.partialorder %v827, 0.0
    %v829 = vmin.f32 %v827, 0.0
    %v830 = vmul.f32 %v829, 1.442695
    %v831 = vpow.pop %v830
    %v832 = vsub.f32 %v831, 1.0
    %v833 = vsel %vm828, %v827, %v832
    %v834 = vld [vmem:[%s4 + $0x6] sm:$0x1]
    %v835 = vlaneseq
    %v836 = vshrl.u32 %v835, 7
    %v837 = vsub.s32 0, %v836
    %v838 = vrot.slane %v834, %v837
    %v839 = vmul.f32 %v833, %v838
    %v840 = vsel %vm70, %v839, 0.0
    %841 = vadd.xlane.f32.xlu0 %v840
    %v842 = vpop.xlane.xlu0 %841
    %v843 = vld [vmem:[%s5 + $0x6] sm:$0x1]
    %v844 = vlaneseq
    %v845 = vshrl.u32 %v844, 7
    %v846 = vsub.s32 0, %v845
    %v847 = vrot.slane %v843, %v846
    %v848 = vadd.f32 %v842, %v847
    %v849 = vsub.f32 0.0, %v848
    %v850 = vmul.f32 %v849, 1.442695
    %v851 = vpow.pop %v850
    %v852 = vadd.f32 %v851, 1.0
    %v853 = vrcp.pop %v852
    %v854 = vmul.f32 1.0, %v853
    %vm855 = vcmp.eq.s32.totalorder %v52, 6
    %857 = vset.pattern.permute.xlu0 0
    %858 = vperm.xlu0 %857, %v854
    %v859 = vpop.permute.xlu0 %858
    %v861 = vsel %vm855, %v859, %v733
    %s862 = scalar_lea.vmem [#allocation2], 224
    %v863 = vld [vmem:[%s862] sm:$0xff]
    %v864 = vld [vmem:[%s862 + $0x8] sm:$0xff]
    %v865 = vld [vmem:[%s862 + $0x10] sm:$0xff]
    %v866 = vld [vmem:[%s862 + $0x18] sm:$0xff]
    %v867 = vld [vmem:[%s2 + $0x7] sm:$0x1]
    %868 = vset.pattern.permute.xlu0 6
    %869 = vperm.xlu0 %868, %v50
    %v870 = vpop.permute.xlu0 %869
    %v872 = vlaneseq
    %v873 = vshrl.u32 %v872, 7
    %v874 = vsub.s32 0, %v873
    %v875 = vrot.slane %v867, %v874
    %v876 = vmul.f32 %v870, %v875
    %v878 = vsel %vm70, %v833, 0
    %880 = vmatprep.subr.mxu0 0.0
    %881 = vmatpush1.msra.mxu0 %v863
    %882 = vmatprep.subr.mxu0 0.0
    %883 = vmatpush1.msra.mxu0 %v864
    %884 = vmatprep.subr.mxu0 0.0
    %885 = vmatpush1.msra.mxu0 %v865
    %886 = vmatprep.subr.mxu0 0.0
    %887 = vmatpush1.msra.mxu0 %v866
    %888 = vmatprep.subr.mxu0 0.0
    %889 = vmatpush1.msra.mxu0 0.0
    %890 = vmatprep.subr.mxu0 0.0
    %891 = vmatpush1.msra.mxu0 0.0
    %892 = vmatprep.subr.mxu0 0.0
    %893 = vmatpush1.msra.mxu0 0.0
    %894 = vmatprep.subr.mxu0 0.0
    %895 = vmatpush1.msra.mxu0 0.0
    %896 = vmatprep.subr.mxu0 0.0
    %897 = vmatpush1.msra.mxu0 0.0
    %898 = vmatprep.subr.mxu0 0.0
    %899 = vmatpush1.msra.mxu0 0.0
    %900 = vmatprep.subr.mxu0 0.0
    %901 = vmatpush1.msra.mxu0 0.0
    %902 = vmatprep.subr.mxu0 0.0
    %903 = vmatpush1.msra.mxu0 0.0
    %904 = vmatprep.subr.mxu0 0.0
    %905 = vmatpush1.msra.mxu0 0.0
    %906 = vmatprep.subr.mxu0 0.0
    %907 = vmatpush1.msra.mxu0 0.0
    %908 = vmatprep.subr.mxu0 0.0
    %909 = vmatpush1.msra.mxu0 0.0
    %910 = vmatprep.subr.mxu0 0.0
    %911 = vmatpush1.msra.mxu0 0.0
    %912 = vmatprep.subr.mxu0 0.0
    %913 = vmatpush1.msra.mxu0 0.0
    %914 = vmatprep.subr.mxu0 0.0
    %915 = vmatpush1.msra.mxu0 0.0
    %916 = vmatprep.subr.mxu0 0.0
    %917 = vmatpush1.msra.mxu0 0.0
    %918 = vmatprep.subr.mxu0 0.0
    %919 = vmatpush1.msra.mxu0 0.0
    %920 = vmatprep.subr.mxu0 0.0
    %921 = vmatpush1.msra.mxu0 0.0
    %922 = vmatprep.subr.mxu0 0.0
    %923 = vmatpush1.msra.mxu0 0.0
    %924 = vmatprep.subr.mxu0 0.0
    %925 = vmatpush1.msra.mxu0 0.0
    %926 = vmatprep.subr.mxu0 0.0
    %927 = vmatpush1.msra.mxu0 0.0
    %928 = vmatprep.subr.mxu0 0.0
    %929 = vmatpush1.msra.mxu0 0.0
    %930 = vmatprep.subr.mxu0 0.0
    %931 = vmatpush1.msra.mxu0 0.0
    %932 = vmatprep.subr.mxu0 0.0
    %933 = vmatpush1.msra.mxu0 0.0
    %934 = vmatprep.subr.mxu0 0.0
    %935 = vmatpush1.msra.mxu0 0.0
    %936 = vmatprep.subr.mxu0 0.0
    %937 = vmatpush1.msra.mxu0 0.0
    %938 = vmatprep.subr.mxu0 0.0
    %939 = vmatpush1.msra.mxu0 0.0
    %940 = vmatprep.subr.mxu0 0.0
    %941 = vmatpush1.msra.mxu0 0.0
    %942 = vmatprep.subr.mxu0 0.0
    %943 = vmatpush1.msra.mxu0 0.0
    %944 = vmatprep.mubr.f32.mxu0 0.0
    %945 = vmatmul.mubr.f32.gmra.mrb[0].mxu0 %v878
    %v946 = vpop.f32.mrb[0].mxu0
    %v947 = vadd.f32 %v876, %v946
    %v948 = vpop.f32.mrb[0].mxu0
    %949 = vdwg.mxu0
    %v950 = vld [vmem:[#allocation5 + $0x7] sm:$0x1]
    %v951 = vlaneseq
    %v952 = vshrl.u32 %v951, 7
    %v953 = vsub.s32 0, %v952
    %v954 = vrot.slane %v950, %v953
    %v955 = vadd.f32 %v947, %v954
    %vm956 = vcmp.gt.f32.partialorder %v955, 0.0
    %v957 = vmin.f32 %v955, 0.0
    %v958 = vmul.f32 %v957, 1.442695
    %v959 = vpow.pop %v958
    %v960 = vsub.f32 %v959, 1.0
    %v961 = vsel %vm956, %v955, %v960
    %v962 = vld [vmem:[%s4 + $0x7] sm:$0x1]
    %v963 = vlaneseq
    %v964 = vshrl.u32 %v963, 7
    %v965 = vsub.s32 0, %v964
    %v966 = vrot.slane %v962, %v965
    %v967 = vmul.f32 %v961, %v966
    %v968 = vsel %vm70, %v967, 0.0
    %969 = vadd.xlane.f32.xlu0 %v968
    %v970 = vpop.xlane.xlu0 %969
    %v971 = vld [vmem:[%s5 + $0x7] sm:$0x1]
    %v972 = vlaneseq
    %v973 = vshrl.u32 %v972, 7
    %v974 = vsub.s32 0, %v973
    %v975 = vrot.slane %v971, %v974
    %v976 = vadd.f32 %v970, %v975
    %v977 = vsub.f32 0.0, %v976
    %v978 = vmul.f32 %v977, 1.442695
    %v979 = vpow.pop %v978
    %v980 = vadd.f32 %v979, 1.0
    %v981 = vrcp.pop %v980
    %v982 = vmul.f32 1.0, %v981
    %vm983 = vcmp.eq.s32.totalorder %v52, 7
    %985 = vset.pattern.permute.xlu0 0
    %986 = vperm.xlu0 %985, %v982
    %v987 = vpop.permute.xlu0 %986
    %v989 = vsel %vm983, %v987, %v861
    %vm990 = vcmask 64512
    %991 = vst.msk [vmem:[#allocation7] sm:$0xff] %vm990, %v989
    // Predicated region
    $region34: #{tpu_custom_call.1} parent=1 // pred_check
      _
    $region35: #{tpu_custom_call.1} parent=1 // pred_check_branch
      %993 = sbr.rel (0) target = $region37
    $region36: #{tpu_custom_call.1} parent=1 // pred_region
      %s995 = ssub.s32 128, 128
      %996 = vsyncadd [#allocation4], %s995
      %s998 = sshll.u32 [#allocation7], 4
      %s999 = int_to_ptr.vmem [resolvable:$true] %s998
      %1001 = dma.vmem_to_hbm [thread:$0]  %s999, 128, %s6, [#allocation4]
    $region37: #{tpu_custom_call.1} parent=1 // pred_fallthru
      _
    // Predicated region
    $region38: #{tpu_custom_call.1} parent=1 // pred_check
      _
    $region39: #{tpu_custom_call.1} parent=1 // pred_check_branch
      %1003 = sbr.rel (0) target = $region41
    $region40: #{tpu_custom_call.1} parent=1 // pred_region
      %1004 = dma.done [#allocation4], 128
    $region41: #{tpu_custom_call.1} parent=1 // pred_fallthru
      _
    %1005 = vsyncpa [#allocation3], 1
    %1006 = vsyncpa [#allocation6], 1
    %1007 = vsyncpa [#allocation4], 1

</llo_original>
